<compile_context>
chip_gen: v7x
topology: tpu7x:2x2x1
jax: 0.10.0
libtpu: 0.0.40
codegen_flags: <defaults>
</compile_context>

<pallas_src>
import functools

import jax
import jax.numpy as jnp
import numpy as np
from jax.experimental import pallas as pl
from jax.experimental.pallas import tpu as pltpu


# ----------------------------- Pallas kernel -----------------------------

def _fused_attention_kernel(x_ref, wqkv_ref, wo_ref, bo_ref, o_ref, *,
                            heads, scale, mxu_dtype):
    # Block shapes: x_ref (bb, n, dim); wqkv (dim, 3*dim); wo (dim, dim);
    # bo (1, dim); o_ref (bb, n, dim).
    bb, n, dim = x_ref.shape
    d = dim // heads

    wqkv = wqkv_ref[...]                      # (dim, 3*dim), pre-cast to mxu_dtype
    wo = wo_ref[...]                          # (dim, dim),   pre-cast to mxu_dtype
    bias = bo_ref[...]                        # (1, dim), f32

    # --- single full-width QKV projection for every row in the block ---
    # Leading-dim collapse only (trailing dim unchanged) -> cheap reshape.
    x2 = x_ref[...].reshape(bb * n, dim).astype(mxu_dtype)
    qkv = jnp.dot(x2, wqkv, preferred_element_type=jnp.float32)     # (bb*n, 3*dim)

    # Fold the scale into q: bb*n*dim multiplies instead of bb*h*n*n.
    q = (qkv[:, :dim] * scale).astype(mxu_dtype)
    k = qkv[:, dim:2 * dim].astype(mxu_dtype)
    v = qkv[:, 2 * dim:].astype(mxu_dtype)

    # --- per-(batch row, head) scaled dot-product attention ---
    # Static unroll over small compile-time constants; per-head slices are plain
    # lane slices, so no in-kernel head-split transposes are needed.
    merged_rows = []
    for bi in range(bb):
        rows = slice(bi * n, (bi + 1) * n)
        head_outs = []
        for hh in range(heads):
            cols = slice(hh * d, (hh + 1) * d)
            qh, kh, vh = q[rows, cols], k[rows, cols], v[rows, cols]   # (n, d)
            dots = jax.lax.dot_general(
                qh, kh, (((1,), (1,)), ((), ())),
                preferred_element_type=jnp.float32)                    # (n, n)
            # TODO(synk): boolean-mask path (F.pad + masked_fill) would go here.
            m = jnp.max(dots, axis=-1, keepdims=True)
            e = jnp.exp(dots - m)
            denom = jnp.sum(e, axis=-1, keepdims=True)
            pv = jnp.dot(e.astype(mxu_dtype), vh,
                         preferred_element_type=jnp.float32)           # (n, d)
            # Normalize AFTER the PV matmul (n*d elems); EUP approx reciprocal.
            head_outs.append(pv * pl.reciprocal(denom, approx=True))
        merged_rows.append(jnp.concatenate(head_outs, axis=-1))        # (n, dim)
    merged = jnp.concatenate(merged_rows, axis=0)                      # (bb*n, dim)

    # --- head merge fused into a single full-width output projection ---
    out = jnp.dot(merged.astype(mxu_dtype), wo,
                  preferred_element_type=jnp.float32) + bias           # (bb*n, dim)
    o_ref[...] = out.reshape(bb, n, dim).astype(o_ref.dtype)


# ------------------------------ wrapper -----------------------------------

def _single_tensorcore_chip():
    try:
        kind = jax.devices()[0].device_kind.lower()
    except Exception:
        return False
    return any(tag in kind for tag in ("v5 lite", "v5e", "v6 lite", "v6e"))


def _default_batch_block(b):
    # v5e/v6e: one TensorCore -> collapse batch into a single grid step (no
    # per-step pipeline overhead).  v7x / unknown: keep >=2 parallel grid steps
    # so both TensorCores get work.
    return b if _single_tensorcore_chip() else 1


def attention_forward(x, w_qkv, w_out, b_out, heads, *,
                      mxu_dtype=jnp.float32, batch_block=None):
    """Equivalent of Attention.forward(x, mask=None).

    mxu_dtype=jnp.bfloat16 casts MXU operands to bf16 (f32 accumulation and
    softmax math) -- the throughput configuration on v6e/v7x.
    """
    b, n, dim = x.shape
    assert dim % heads == 0
    scale = dim ** (-0.5)   # NOTE: PyTorch module scales by full dim, not head_dim.

    if batch_block is None:
        batch_block = _default_batch_block(b)
    if b % batch_block != 0:
        batch_block = 1

    wqkv_c = w_qkv.astype(mxu_dtype)              # one-time cast outside the kernel
    wo_c = w_out.astype(mxu_dtype)
    bias2d = b_out.reshape(1, dim).astype(jnp.float32)

    kernel = functools.partial(_fused_attention_kernel, heads=heads,
                               scale=scale, mxu_dtype=mxu_dtype)
    return pl.pallas_call(
        kernel,
        out_shape=jax.ShapeDtypeStruct((b, n, dim), x.dtype),
        grid=(b // batch_block,),
        in_specs=[
            pl.BlockSpec((batch_block, n, dim), lambda i: (i, 0, 0)),   # x (per block)
            pl.BlockSpec((dim, 3 * dim), lambda i: (0, 0)),             # w_qkv (grid-invariant)
            pl.BlockSpec((dim, dim), lambda i: (0, 0)),                 # w_out (grid-invariant)
            pl.BlockSpec((1, dim), lambda i: (0, 0)),                   # bias  (grid-invariant)
        ],
        out_specs=pl.BlockSpec((batch_block, n, dim), lambda i: (i, 0, 0)),
        compiler_params=pltpu.CompilerParams(
            dimension_semantics=("parallel",)),
    )(x, wqkv_c, wo_c, bias2d)


# ------------------------------ reference ----------------------------------

def attention_reference(x, w_qkv, w_out, b_out, heads):
    b, n, dim = x.shape
    d = dim // heads
    scale = dim ** (-0.5)
    hi = jax.lax.Precision.HIGHEST
    qkv = jnp.dot(x, w_qkv, precision=hi)
    q, k, v = jnp.split(qkv, 3, axis=-1)

    def rh(t):
        return t.reshape(b, n, heads, d).transpose(0, 2, 1, 3)

    q, k, v = rh(q), rh(k), rh(v)
    dots = jnp.einsum('bhid,bhjd->bhij', q, k, precision=hi) * scale
    attn = jax.nn.softmax(dots, axis=-1)
    out = jnp.einsum('bhij,bhjd->bhid', attn, v, precision=hi)
    out = out.transpose(0, 2, 1, 3).reshape(b, n, dim)
    return jnp.dot(out, w_out, precision=hi) + b_out


# -------------------------------- main --------------------------------------

if __name__ == "__main__":
    # dim=128 keeps head_dim=16 and makes the stored output slab lane-dense.
    b, n, dim, heads = 2, 8, 128, 8

    key = jax.random.PRNGKey(0)
    k1, k2, k3, k4 = jax.random.split(key, 4)
    x = jax.random.normal(k1, (b, n, dim), dtype=jnp.float32)
    # Synthetic params (nn.Linear(dim, 3*dim, bias=False) + nn.Linear(dim, dim)).
    w_qkv = jax.random.normal(k2, (dim, 3 * dim), dtype=jnp.float32) * (dim ** -0.5)
    w_out = jax.random.normal(k3, (dim, dim), dtype=jnp.float32) * (dim ** -0.5)
    b_out = jax.random.normal(k4, (dim,), dtype=jnp.float32) * 0.01

    ref = np.asarray(attention_reference(x, w_qkv, w_out, b_out, heads))

    # f32 MXU-operand path (accuracy config).
    out = jax.block_until_ready(attention_forward(x, w_qkv, w_out, b_out, heads))
    assert out.shape == (b, n, dim)
    assert np.allclose(np.asarray(out), ref, atol=2e-2, rtol=2e-2), \
        "Pallas f32 output mismatch vs JAX reference"

    # bf16 MXU-operand path (v6e/v7x throughput config); f32 accumulation/softmax.
    out_bf16 = jax.block_until_ready(
        attention_forward(x, w_qkv, w_out, b_out, heads, mxu_dtype=jnp.bfloat16))
    rel = (np.linalg.norm(np.asarray(out_bf16, np.float32) - ref)
           / np.linalg.norm(ref))
    assert rel < 3e-2, f"Pallas bf16 output relative error too large: {rel}"

    print("KERNEL_OK")
</pallas_src>

<mosaic_0001>
module attributes {stable_mosaic.version = 11 : i64} {
  func.func @_fused_attention_kernel(%arg0: i32, %arg1: memref<1x8x128xf32, #tpu.memory_space<vmem>>, %arg2: memref<128x384xf32, #tpu.memory_space<vmem>>, %arg3: memref<128x128xf32, #tpu.memory_space<vmem>>, %arg4: memref<1x128xf32, #tpu.memory_space<vmem>>, %arg5: memref<1x8x128xf32, #tpu.memory_space<vmem>>) attributes {dimension_semantics = [#tpu.dimension_semantics<parallel>], iteration_bounds = array<i64: 2>, scalar_prefetch = 0 : i64, scratch_operands = 0 : i64, tpu.core_type = #tpu.core_type<tc>, window_params = [{transform_indices = @transform_0, window_bounds = array<i64: 1, 8, 128>}, {pipeline_mode = #tpu.pipeline_mode<synchronous>, transform_indices = @transform_1, window_bounds = array<i64: 128, 384>}, {pipeline_mode = #tpu.pipeline_mode<synchronous>, transform_indices = @transform_2, window_bounds = array<i64: 128, 128>}, {pipeline_mode = #tpu.pipeline_mode<synchronous>, transform_indices = @transform_3, window_bounds = array<i64: 1, 128>}, {transform_indices = @transform_4, window_bounds = array<i64: 1, 8, 128>}]} {
    %c0 = arith.constant 0 : index
    %c0_0 = arith.constant 0 : index
    %0 = vector.load %arg2[%c0, %c0_0] : memref<128x384xf32, #tpu.memory_space<vmem>>, vector<128x384xf32>
    %c0_1 = arith.constant 0 : index
    %c0_2 = arith.constant 0 : index
    %1 = vector.load %arg3[%c0_1, %c0_2] : memref<128x128xf32, #tpu.memory_space<vmem>>, vector<128x128xf32>
    %c0_3 = arith.constant 0 : index
    %c0_4 = arith.constant 0 : index
    %2 = vector.load %arg4[%c0_3, %c0_4] : memref<1x128xf32, #tpu.memory_space<vmem>>, vector<1x128xf32>
    %c0_5 = arith.constant 0 : index
    %c0_6 = arith.constant 0 : index
    %c0_7 = arith.constant 0 : index
    %3 = vector.load %arg1[%c0_5, %c0_6, %c0_7] : memref<1x8x128xf32, #tpu.memory_space<vmem>>, vector<1x8x128xf32>
    %4 = vector.shape_cast %3 : vector<1x8x128xf32> to vector<8x128xf32>
    %cst = arith.constant dense<0.000000e+00> : vector<8x384xf32>
    %5 = tpu.matmul %4, %0, %cst {dimension_numbers = #tpu.dot_dimension_numbers<[1], [0], [0], [1], [0, 0, 1, 1], [], []>} : vector<8x128xf32>, vector<128x384xf32>, vector<8x384xf32> -> vector<8x384xf32>
    %6 = vector.extract_strided_slice %5 {offsets = [0, 0], sizes = [8, 128], strides = [1, 1]} : vector<8x384xf32> to vector<8x128xf32>
    %cst_8 = arith.constant 0.0883883461 : f32
    %7 = vector.broadcast %cst_8 : f32 to vector<8x128xf32>
    %8 = arith.mulf %6, %7 : vector<8x128xf32>
    %9 = vector.extract_strided_slice %5 {offsets = [0, 128], sizes = [8, 128], strides = [1, 1]} : vector<8x384xf32> to vector<8x128xf32>
    %10 = vector.extract_strided_slice %5 {offsets = [0, 256], sizes = [8, 128], strides = [1, 1]} : vector<8x384xf32> to vector<8x128xf32>
    %11 = vector.extract_strided_slice %8 {offsets = [0, 0], sizes = [8, 16], strides = [1, 1]} : vector<8x128xf32> to vector<8x16xf32>
    %12 = vector.extract_strided_slice %9 {offsets = [0, 0], sizes = [8, 16], strides = [1, 1]} : vector<8x128xf32> to vector<8x16xf32>
    %13 = vector.extract_strided_slice %10 {offsets = [0, 0], sizes = [8, 16], strides = [1, 1]} : vector<8x128xf32> to vector<8x16xf32>
    %cst_9 = arith.constant dense<0.000000e+00> : vector<8x8xf32>
    %14 = tpu.matmul %11, %12, %cst_9 {dimension_numbers = #tpu.dot_dimension_numbers<[1], [1], [0], [0], [0, 0, 1, 0], [], []>} : vector<8x16xf32>, vector<8x16xf32>, vector<8x8xf32> -> vector<8x8xf32>
    %cst_10 = arith.constant dense<0xFF800000> : vector<8xf32>
    %15 = vector.multi_reduction <maximumf>, %14, %cst_10 [1] : vector<8x8xf32> to vector<8xf32>
    %16 = vector.shape_cast %15 : vector<8xf32> to vector<8x1xf32>
    %17 = vector.broadcast %16 : vector<8x1xf32> to vector<8x8xf32>
    %18 = arith.subf %14, %17 : vector<8x8xf32>
    %19 = math.exp %18 : vector<8x8xf32>
    %cst_11 = arith.constant dense<0.000000e+00> : vector<8xf32>
    %20 = vector.multi_reduction <add>, %19, %cst_11 [1] : vector<8x8xf32> to vector<8xf32>
    %21 = vector.shape_cast %20 : vector<8xf32> to vector<8x1xf32>
    %cst_12 = arith.constant dense<0.000000e+00> : vector<8x16xf32>
    %22 = tpu.matmul %19, %13, %cst_12 {dimension_numbers = #tpu.dot_dimension_numbers<[1], [0], [0], [1], [0, 0, 1, 1], [], []>} : vector<8x8xf32>, vector<8x16xf32>, vector<8x16xf32> -> vector<8x16xf32>
    %23 = tpu.reciprocal %21 {approx = true} : vector<8x1xf32> -> vector<8x1xf32>
    %24 = vector.broadcast %23 : vector<8x1xf32> to vector<8x16xf32>
    %25 = arith.mulf %22, %24 : vector<8x16xf32>
    %26 = vector.extract_strided_slice %8 {offsets = [0, 16], sizes = [8, 16], strides = [1, 1]} : vector<8x128xf32> to vector<8x16xf32>
    %27 = vector.extract_strided_slice %9 {offsets = [0, 16], sizes = [8, 16], strides = [1, 1]} : vector<8x128xf32> to vector<8x16xf32>
    %28 = vector.extract_strided_slice %10 {offsets = [0, 16], sizes = [8, 16], strides = [1, 1]} : vector<8x128xf32> to vector<8x16xf32>
    %cst_13 = arith.constant dense<0.000000e+00> : vector<8x8xf32>
    %29 = tpu.matmul %26, %27, %cst_13 {dimension_numbers = #tpu.dot_dimension_numbers<[1], [1], [0], [0], [0, 0, 1, 0], [], []>} : vector<8x16xf32>, vector<8x16xf32>, vector<8x8xf32> -> vector<8x8xf32>
    %cst_14 = arith.constant dense<0xFF800000> : vector<8xf32>
    %30 = vector.multi_reduction <maximumf>, %29, %cst_14 [1] : vector<8x8xf32> to vector<8xf32>
    %31 = vector.shape_cast %30 : vector<8xf32> to vector<8x1xf32>
    %32 = vector.broadcast %31 : vector<8x1xf32> to vector<8x8xf32>
    %33 = arith.subf %29, %32 : vector<8x8xf32>
    %34 = math.exp %33 : vector<8x8xf32>
    %cst_15 = arith.constant dense<0.000000e+00> : vector<8xf32>
    %35 = vector.multi_reduction <add>, %34, %cst_15 [1] : vector<8x8xf32> to vector<8xf32>
    %36 = vector.shape_cast %35 : vector<8xf32> to vector<8x1xf32>
    %cst_16 = arith.constant dense<0.000000e+00> : vector<8x16xf32>
    %37 = tpu.matmul %34, %28, %cst_16 {dimension_numbers = #tpu.dot_dimension_numbers<[1], [0], [0], [1], [0, 0, 1, 1], [], []>} : vector<8x8xf32>, vector<8x16xf32>, vector<8x16xf32> -> vector<8x16xf32>
    %38 = tpu.reciprocal %36 {approx = true} : vector<8x1xf32> -> vector<8x1xf32>
    %39 = vector.broadcast %38 : vector<8x1xf32> to vector<8x16xf32>
    %40 = arith.mulf %37, %39 : vector<8x16xf32>
    %41 = vector.extract_strided_slice %8 {offsets = [0, 32], sizes = [8, 16], strides = [1, 1]} : vector<8x128xf32> to vector<8x16xf32>
    %42 = vector.extract_strided_slice %9 {offsets = [0, 32], sizes = [8, 16], strides = [1, 1]} : vector<8x128xf32> to vector<8x16xf32>
    %43 = vector.extract_strided_slice %10 {offsets = [0, 32], sizes = [8, 16], strides = [1, 1]} : vector<8x128xf32> to vector<8x16xf32>
    %cst_17 = arith.constant dense<0.000000e+00> : vector<8x8xf32>
    %44 = tpu.matmul %41, %42, %cst_17 {dimension_numbers = #tpu.dot_dimension_numbers<[1], [1], [0], [0], [0, 0, 1, 0], [], []>} : vector<8x16xf32>, vector<8x16xf32>, vector<8x8xf32> -> vector<8x8xf32>
    %cst_18 = arith.constant dense<0xFF800000> : vector<8xf32>
    %45 = vector.multi_reduction <maximumf>, %44, %cst_18 [1] : vector<8x8xf32> to vector<8xf32>
    %46 = vector.shape_cast %45 : vector<8xf32> to vector<8x1xf32>
    %47 = vector.broadcast %46 : vector<8x1xf32> to vector<8x8xf32>
    %48 = arith.subf %44, %47 : vector<8x8xf32>
    %49 = math.exp %48 : vector<8x8xf32>
    %cst_19 = arith.constant dense<0.000000e+00> : vector<8xf32>
    %50 = vector.multi_reduction <add>, %49, %cst_19 [1] : vector<8x8xf32> to vector<8xf32>
    %51 = vector.shape_cast %50 : vector<8xf32> to vector<8x1xf32>
    %cst_20 = arith.constant dense<0.000000e+00> : vector<8x16xf32>
    %52 = tpu.matmul %49, %43, %cst_20 {dimension_numbers = #tpu.dot_dimension_numbers<[1], [0], [0], [1], [0, 0, 1, 1], [], []>} : vector<8x8xf32>, vector<8x16xf32>, vector<8x16xf32> -> vector<8x16xf32>
    %53 = tpu.reciprocal %51 {approx = true} : vector<8x1xf32> -> vector<8x1xf32>
    %54 = vector.broadcast %53 : vector<8x1xf32> to vector<8x16xf32>
    %55 = arith.mulf %52, %54 : vector<8x16xf32>
    %56 = vector.extract_strided_slice %8 {offsets = [0, 48], sizes = [8, 16], strides = [1, 1]} : vector<8x128xf32> to vector<8x16xf32>
    %57 = vector.extract_strided_slice %9 {offsets = [0, 48], sizes = [8, 16], strides = [1, 1]} : vector<8x128xf32> to vector<8x16xf32>
    %58 = vector.extract_strided_slice %10 {offsets = [0, 48], sizes = [8, 16], strides = [1, 1]} : vector<8x128xf32> to vector<8x16xf32>
    %cst_21 = arith.constant dense<0.000000e+00> : vector<8x8xf32>
    %59 = tpu.matmul %56, %57, %cst_21 {dimension_numbers = #tpu.dot_dimension_numbers<[1], [1], [0], [0], [0, 0, 1, 0], [], []>} : vector<8x16xf32>, vector<8x16xf32>, vector<8x8xf32> -> vector<8x8xf32>
    %cst_22 = arith.constant dense<0xFF800000> : vector<8xf32>
    %60 = vector.multi_reduction <maximumf>, %59, %cst_22 [1] : vector<8x8xf32> to vector<8xf32>
    %61 = vector.shape_cast %60 : vector<8xf32> to vector<8x1xf32>
    %62 = vector.broadcast %61 : vector<8x1xf32> to vector<8x8xf32>
    %63 = arith.subf %59, %62 : vector<8x8xf32>
    %64 = math.exp %63 : vector<8x8xf32>
    %cst_23 = arith.constant dense<0.000000e+00> : vector<8xf32>
    %65 = vector.multi_reduction <add>, %64, %cst_23 [1] : vector<8x8xf32> to vector<8xf32>
    %66 = vector.shape_cast %65 : vector<8xf32> to vector<8x1xf32>
    %cst_24 = arith.constant dense<0.000000e+00> : vector<8x16xf32>
    %67 = tpu.matmul %64, %58, %cst_24 {dimension_numbers = #tpu.dot_dimension_numbers<[1], [0], [0], [1], [0, 0, 1, 1], [], []>} : vector<8x8xf32>, vector<8x16xf32>, vector<8x16xf32> -> vector<8x16xf32>
    %68 = tpu.reciprocal %66 {approx = true} : vector<8x1xf32> -> vector<8x1xf32>
    %69 = vector.broadcast %68 : vector<8x1xf32> to vector<8x16xf32>
    %70 = arith.mulf %67, %69 : vector<8x16xf32>
    %71 = vector.extract_strided_slice %8 {offsets = [0, 64], sizes = [8, 16], strides = [1, 1]} : vector<8x128xf32> to vector<8x16xf32>
    %72 = vector.extract_strided_slice %9 {offsets = [0, 64], sizes = [8, 16], strides = [1, 1]} : vector<8x128xf32> to vector<8x16xf32>
    %73 = vector.extract_strided_slice %10 {offsets = [0, 64], sizes = [8, 16], strides = [1, 1]} : vector<8x128xf32> to vector<8x16xf32>
    %cst_25 = arith.constant dense<0.000000e+00> : vector<8x8xf32>
    %74 = tpu.matmul %71, %72, %cst_25 {dimension_numbers = #tpu.dot_dimension_numbers<[1], [1], [0], [0], [0, 0, 1, 0], [], []>} : vector<8x16xf32>, vector<8x16xf32>, vector<8x8xf32> -> vector<8x8xf32>
    %cst_26 = arith.constant dense<0xFF800000> : vector<8xf32>
    %75 = vector.multi_reduction <maximumf>, %74, %cst_26 [1] : vector<8x8xf32> to vector<8xf32>
    %76 = vector.shape_cast %75 : vector<8xf32> to vector<8x1xf32>
    %77 = vector.broadcast %76 : vector<8x1xf32> to vector<8x8xf32>
    %78 = arith.subf %74, %77 : vector<8x8xf32>
    %79 = math.exp %78 : vector<8x8xf32>
    %cst_27 = arith.constant dense<0.000000e+00> : vector<8xf32>
    %80 = vector.multi_reduction <add>, %79, %cst_27 [1] : vector<8x8xf32> to vector<8xf32>
    %81 = vector.shape_cast %80 : vector<8xf32> to vector<8x1xf32>
    %cst_28 = arith.constant dense<0.000000e+00> : vector<8x16xf32>
    %82 = tpu.matmul %79, %73, %cst_28 {dimension_numbers = #tpu.dot_dimension_numbers<[1], [0], [0], [1], [0, 0, 1, 1], [], []>} : vector<8x8xf32>, vector<8x16xf32>, vector<8x16xf32> -> vector<8x16xf32>
    %83 = tpu.reciprocal %81 {approx = true} : vector<8x1xf32> -> vector<8x1xf32>
    %84 = vector.broadcast %83 : vector<8x1xf32> to vector<8x16xf32>
    %85 = arith.mulf %82, %84 : vector<8x16xf32>
    %86 = vector.extract_strided_slice %8 {offsets = [0, 80], sizes = [8, 16], strides = [1, 1]} : vector<8x128xf32> to vector<8x16xf32>
    %87 = vector.extract_strided_slice %9 {offsets = [0, 80], sizes = [8, 16], strides = [1, 1]} : vector<8x128xf32> to vector<8x16xf32>
    %88 = vector.extract_strided_slice %10 {offsets = [0, 80], sizes = [8, 16], strides = [1, 1]} : vector<8x128xf32> to vector<8x16xf32>
    %cst_29 = arith.constant dense<0.000000e+00> : vector<8x8xf32>
    %89 = tpu.matmul %86, %87, %cst_29 {dimension_numbers = #tpu.dot_dimension_numbers<[1], [1], [0], [0], [0, 0, 1, 0], [], []>} : vector<8x16xf32>, vector<8x16xf32>, vector<8x8xf32> -> vector<8x8xf32>
    %cst_30 = arith.constant dense<0xFF800000> : vector<8xf32>
    %90 = vector.multi_reduction <maximumf>, %89, %cst_30 [1] : vector<8x8xf32> to vector<8xf32>
    %91 = vector.shape_cast %90 : vector<8xf32> to vector<8x1xf32>
    %92 = vector.broadcast %91 : vector<8x1xf32> to vector<8x8xf32>
    %93 = arith.subf %89, %92 : vector<8x8xf32>
    %94 = math.exp %93 : vector<8x8xf32>
    %cst_31 = arith.constant dense<0.000000e+00> : vector<8xf32>
    %95 = vector.multi_reduction <add>, %94, %cst_31 [1] : vector<8x8xf32> to vector<8xf32>
    %96 = vector.shape_cast %95 : vector<8xf32> to vector<8x1xf32>
    %cst_32 = arith.constant dense<0.000000e+00> : vector<8x16xf32>
    %97 = tpu.matmul %94, %88, %cst_32 {dimension_numbers = #tpu.dot_dimension_numbers<[1], [0], [0], [1], [0, 0, 1, 1], [], []>} : vector<8x8xf32>, vector<8x16xf32>, vector<8x16xf32> -> vector<8x16xf32>
    %98 = tpu.reciprocal %96 {approx = true} : vector<8x1xf32> -> vector<8x1xf32>
    %99 = vector.broadcast %98 : vector<8x1xf32> to vector<8x16xf32>
    %100 = arith.mulf %97, %99 : vector<8x16xf32>
    %101 = vector.extract_strided_slice %8 {offsets = [0, 96], sizes = [8, 16], strides = [1, 1]} : vector<8x128xf32> to vector<8x16xf32>
    %102 = vector.extract_strided_slice %9 {offsets = [0, 96], sizes = [8, 16], strides = [1, 1]} : vector<8x128xf32> to vector<8x16xf32>
    %103 = vector.extract_strided_slice %10 {offsets = [0, 96], sizes = [8, 16], strides = [1, 1]} : vector<8x128xf32> to vector<8x16xf32>
    %cst_33 = arith.constant dense<0.000000e+00> : vector<8x8xf32>
    %104 = tpu.matmul %101, %102, %cst_33 {dimension_numbers = #tpu.dot_dimension_numbers<[1], [1], [0], [0], [0, 0, 1, 0], [], []>} : vector<8x16xf32>, vector<8x16xf32>, vector<8x8xf32> -> vector<8x8xf32>
    %cst_34 = arith.constant dense<0xFF800000> : vector<8xf32>
    %105 = vector.multi_reduction <maximumf>, %104, %cst_34 [1] : vector<8x8xf32> to vector<8xf32>
    %106 = vector.shape_cast %105 : vector<8xf32> to vector<8x1xf32>
    %107 = vector.broadcast %106 : vector<8x1xf32> to vector<8x8xf32>
    %108 = arith.subf %104, %107 : vector<8x8xf32>
    %109 = math.exp %108 : vector<8x8xf32>
    %cst_35 = arith.constant dense<0.000000e+00> : vector<8xf32>
    %110 = vector.multi_reduction <add>, %109, %cst_35 [1] : vector<8x8xf32> to vector<8xf32>
    %111 = vector.shape_cast %110 : vector<8xf32> to vector<8x1xf32>
    %cst_36 = arith.constant dense<0.000000e+00> : vector<8x16xf32>
    %112 = tpu.matmul %109, %103, %cst_36 {dimension_numbers = #tpu.dot_dimension_numbers<[1], [0], [0], [1], [0, 0, 1, 1], [], []>} : vector<8x8xf32>, vector<8x16xf32>, vector<8x16xf32> -> vector<8x16xf32>
    %113 = tpu.reciprocal %111 {approx = true} : vector<8x1xf32> -> vector<8x1xf32>
    %114 = vector.broadcast %113 : vector<8x1xf32> to vector<8x16xf32>
    %115 = arith.mulf %112, %114 : vector<8x16xf32>
    %116 = vector.extract_strided_slice %8 {offsets = [0, 112], sizes = [8, 16], strides = [1, 1]} : vector<8x128xf32> to vector<8x16xf32>
    %117 = vector.extract_strided_slice %9 {offsets = [0, 112], sizes = [8, 16], strides = [1, 1]} : vector<8x128xf32> to vector<8x16xf32>
    %118 = vector.extract_strided_slice %10 {offsets = [0, 112], sizes = [8, 16], strides = [1, 1]} : vector<8x128xf32> to vector<8x16xf32>
    %cst_37 = arith.constant dense<0.000000e+00> : vector<8x8xf32>
    %119 = tpu.matmul %116, %117, %cst_37 {dimension_numbers = #tpu.dot_dimension_numbers<[1], [1], [0], [0], [0, 0, 1, 0], [], []>} : vector<8x16xf32>, vector<8x16xf32>, vector<8x8xf32> -> vector<8x8xf32>
    %cst_38 = arith.constant dense<0xFF800000> : vector<8xf32>
    %120 = vector.multi_reduction <maximumf>, %119, %cst_38 [1] : vector<8x8xf32> to vector<8xf32>
    %121 = vector.shape_cast %120 : vector<8xf32> to vector<8x1xf32>
    %122 = vector.broadcast %121 : vector<8x1xf32> to vector<8x8xf32>
    %123 = arith.subf %119, %122 : vector<8x8xf32>
    %124 = math.exp %123 : vector<8x8xf32>
    %cst_39 = arith.constant dense<0.000000e+00> : vector<8xf32>
    %125 = vector.multi_reduction <add>, %124, %cst_39 [1] : vector<8x8xf32> to vector<8xf32>
    %126 = vector.shape_cast %125 : vector<8xf32> to vector<8x1xf32>
    %cst_40 = arith.constant dense<0.000000e+00> : vector<8x16xf32>
    %127 = tpu.matmul %124, %118, %cst_40 {dimension_numbers = #tpu.dot_dimension_numbers<[1], [0], [0], [1], [0, 0, 1, 1], [], []>} : vector<8x8xf32>, vector<8x16xf32>, vector<8x16xf32> -> vector<8x16xf32>
    %128 = tpu.reciprocal %126 {approx = true} : vector<8x1xf32> -> vector<8x1xf32>
    %129 = vector.broadcast %128 : vector<8x1xf32> to vector<8x16xf32>
    %130 = arith.mulf %127, %129 : vector<8x16xf32>
    %131 = tpu.concatenate %25, %40, %55, %70, %85, %100, %115, %130 in 1 : vector<8x16xf32>, vector<8x16xf32>, vector<8x16xf32>, vector<8x16xf32>, vector<8x16xf32>, vector<8x16xf32>, vector<8x16xf32>, vector<8x16xf32> -> vector<8x128xf32>
    %cst_41 = arith.constant dense<0.000000e+00> : vector<8x128xf32>
    %132 = tpu.matmul %131, %1, %cst_41 {dimension_numbers = #tpu.dot_dimension_numbers<[1], [0], [0], [1], [0, 0, 1, 1], [], []>} : vector<8x128xf32>, vector<128x128xf32>, vector<8x128xf32> -> vector<8x128xf32>
    %133 = vector.broadcast %2 : vector<1x128xf32> to vector<8x128xf32>
    %134 = arith.addf %132, %133 : vector<8x128xf32>
    %135 = vector.shape_cast %134 : vector<8x128xf32> to vector<1x8x128xf32>
    %c0_42 = arith.constant 0 : index
    %c0_43 = arith.constant 0 : index
    %c0_44 = arith.constant 0 : index
    %136 = vector.load %arg5[%c0_42, %c0_43, %c0_44] : memref<1x8x128xf32, #tpu.memory_space<vmem>>, vector<1x8x128xf32>
    tpu.vector_store %arg5[%c0_42, %c0_43, %c0_44], %135 {strides = array<i32>} : memref<1x8x128xf32, #tpu.memory_space<vmem>>, vector<1x8x128xf32>,
    return
  }
  func.func @transform_0(%arg0: i32) -> (i32, i32, i32) {
    %c0_i32 = arith.constant 0 : i32
    %c0_i32_0 = arith.constant 0 : i32
    %c0_i32_1 = arith.constant 0 : i32
    return %arg0, %c0_i32, %c0_i32_0 : i32, i32, i32
  }
  func.func @transform_1(%arg0: i32) -> (i32, i32) {
    %c0_i32 = arith.constant 0 : i32
    %c0_i32_0 = arith.constant 0 : i32
    %c0_i32_1 = arith.constant 0 : i32
    return %c0_i32, %c0_i32_0 : i32, i32
  }
  func.func @transform_2(%arg0: i32) -> (i32, i32) {
    %c0_i32 = arith.constant 0 : i32
    %c0_i32_0 = arith.constant 0 : i32
    %c0_i32_1 = arith.constant 0 : i32
    return %c0_i32, %c0_i32_0 : i32, i32
  }
  func.func @transform_3(%arg0: i32) -> (i32, i32) {
    %c0_i32 = arith.constant 0 : i32
    %c0_i32_0 = arith.constant 0 : i32
    %c0_i32_1 = arith.constant 0 : i32
    return %c0_i32, %c0_i32_0 : i32, i32
  }
  func.func @transform_4(%arg0: i32) -> (i32, i32, i32) {
    %c0_i32 = arith.constant 0 : i32
    %c0_i32_0 = arith.constant 0 : i32
    %c0_i32_1 = arith.constant 0 : i32
    return %arg0, %c0_i32, %c0_i32_0 : i32, i32, i32
  }
}

</mosaic_0001>

<llo_original>
// kernel: tpu_custom_call.1
$region0: #{tpu_custom_call.1}
  #allocation0 [shape = 'u32[]', space=smem, size = 0x4, offset = 0x4, fixed_abs, tag = 'smem constant byte address 0x4 - core index']
  #allocation1 [shape = 'u32[144,128]{1,0:T(1,128)}', space=vmem, size = 0x12000, scoped, tag = 'internal scratch']
  %s0 = inlined_call_operand.hbm [shape: f32[2,8,128], index: 0, kind: input, shape index: {}]
  %s1 = inlined_call_operand.hbm [shape: f32[128,384], index: 1, kind: input, shape index: {}]
  %s2 = inlined_call_operand.hbm [shape: f32[128,128], index: 2, kind: input, shape index: {}]
  %s3 = inlined_call_operand.vmem [shape: f32[1,128], index: 3, kind: input, shape index: {}]
  %s4 = inlined_call_operand.hbm [shape: f32[2,8,128], index: 4, kind: output, shape index: {}]
  %s5 = sld [smem:[#allocation0]]
  $region61: #{tpu_custom_call.1} parent=0
    _
  %s7 = ssub.s32 1, %s5
  %s8 = scalar_select 0, %s7, %s5
  $region1: #{tpu_custom_call.1} parent=0
    #allocation2 [shape = 'u8[8192]{0}', space=vmem, size = 0x2000, scoped, tag = 'input window, operand 0']
    #allocation3 [shape = 's32[2]{0}', space=sflag, size = 0x8, scoped, tag = 'scoped memory for tpu_custom_call.1']
    #allocation4 [shape = 's32[2]{0}', space=sflag, size = 0x8, scoped, tag = 'scoped memory for tpu_custom_call.1']
    #allocation5 [shape = 'u8[196608]{0}', space=vmem, size = 0x30000, scoped, tag = 'input window, operand 1, single buffered']
    #allocation6 [shape = 's32[1]{0}', space=sflag, size = 0x4, scoped, tag = 'scoped memory for tpu_custom_call.1']
    #allocation7 [shape = 'u8[65536]{0}', space=vmem, size = 0x10000, scoped, tag = 'input window, operand 2, single buffered']
    #allocation8 [shape = 'u8[8192]{0}', space=vmem, size = 0x2000, scoped, tag = 'output window, operand 0']
    %9 = vsyncpa [#allocation3], 0
    %s10 = scalar_lea.sflag [#allocation3], 1
    %11 = vsyncpa %s10, 0
    %12 = vsyncpa [#allocation6], 0
    %13 = vsyncpa [#allocation4], 0
    %s14 = scalar_lea.sflag [#allocation4], 1
    %15 = vsyncpa %s14, 0
    loop: start=0, step=1, limit=4
    $region2: #{tpu_custom_call.1} parent=1 // loop_pre_header
      _
    $region3: #{tpu_custom_call.1} parent=1 // loop_header
      %s17 = sphi 0, %s21
      %p18 = scmp.ge.s32.totalorder %s17, 4
      %s27 = sphi 0, %s29
      %s30 = sphi 0, %s27
      %s31 = sphi 0, %s30
      %s47 = sphi 0, %s31
      %s51 = sphi 0, %s51
      %s53 = sphi 0, %s51
      %s54 = sphi 0, %s53
      %s68 = sphi 0, %s54
      %s72 = sphi 0, %s72
      %s74 = sphi 0, %s72
      %s75 = sphi 0, %s74
      %s89 = sphi 0, %s75
      %s93 = sphi 0, %s93
      %s95 = sphi 0, %s93
      %s96 = sphi 0, %s95
      %s110 = sphi 0, %s96
      %s116 = sphi 0, %s118
      %s119 = sphi 0, %s116
      %s120 = sphi 0, %s119
      %s136 = sphi 0, %s120
    $region4: #{tpu_custom_call.1} parent=1 // loop_header_branch
      %20 = sbr.rel (%p18) target = $region8
    $region5: #{tpu_custom_call.1} parent=1 // loop_body
      %s22 = ssub.s32 %s17, 1
      %s23 = ssub.s32 %s17, 2
      %s24 = sadd.s32 %s17, 1
      %s25 = ssub.s32 %s17, %s24
      %p26 = scmp.eq.s32.totalorder %s25, 0
      %s28 = sadd.s32 %s27, 1
      %s29 = scalar_select %p26, %s27, %s28
      %p32 = pneg %p26
      %p33 = scmp.eq.s32.totalorder %s17, 1
      %p34 = por %p32, %p33
      %p35 = scmp.ne.s32.totalorder %s27, %s30
      %p36 = scmp.eq.s32.totalorder %s17, 0
      %p37 = por %p35, %p36
      %p38 = scmp.ne.s32.totalorder %s27, %s30
      %p39 = scmp.eq.s32.totalorder %s22, 1
      %p40 = por %p38, %p39
      %p41 = scmp.ne.s32.totalorder %s30, %s31
      %p42 = scmp.eq.s32.totalorder %s22, 0
      %p43 = por %p41, %p42
      %p44 = scmp.ne.s32.totalorder %s30, %s31
      %p45 = scmp.eq.s32.totalorder %s23, 1
      %p46 = por %p44, %p45
      %p48 = scmp.ne.s32.totalorder %s31, %s47
      %p49 = scmp.eq.s32.totalorder %s23, 0
      %p50 = por %p48, %p49
      %s52 = sadd.s32 %s51, 1
      %p55 = scmp.eq.s32.totalorder %s17, 1
      %p56 = scmp.ne.s32.totalorder %s51, %s53
      %p57 = scmp.eq.s32.totalorder %s17, 0
      %p58 = por %p56, %p57
      %p59 = scmp.ne.s32.totalorder %s51, %s53
      %p60 = scmp.eq.s32.totalorder %s22, 1
      %p61 = por %p59, %p60
      %p62 = scmp.ne.s32.totalorder %s53, %s54
      %p63 = scmp.eq.s32.totalorder %s22, 0
      %p64 = por %p62, %p63
      %p65 = scmp.ne.s32.totalorder %s53, %s54
      %p66 = scmp.eq.s32.totalorder %s23, 1
      %p67 = por %p65, %p66
      %p69 = scmp.ne.s32.totalorder %s54, %s68
      %p70 = scmp.eq.s32.totalorder %s23, 0
      %p71 = por %p69, %p70
      %s73 = sadd.s32 %s72, 1
      %p76 = scmp.eq.s32.totalorder %s17, 1
      %p77 = scmp.ne.s32.totalorder %s72, %s74
      %p78 = scmp.eq.s32.totalorder %s17, 0
      %p79 = por %p77, %p78
      %p80 = scmp.ne.s32.totalorder %s72, %s74
      %p81 = scmp.eq.s32.totalorder %s22, 1
      %p82 = por %p80, %p81
      %p83 = scmp.ne.s32.totalorder %s74, %s75
      %p84 = scmp.eq.s32.totalorder %s22, 0
      %p85 = por %p83, %p84
      %p86 = scmp.ne.s32.totalorder %s74, %s75
      %p87 = scmp.eq.s32.totalorder %s23, 1
      %p88 = por %p86, %p87
      %p90 = scmp.ne.s32.totalorder %s75, %s89
      %p91 = scmp.eq.s32.totalorder %s23, 0
      %p92 = por %p90, %p91
      %s94 = sadd.s32 %s93, 1
      %p97 = scmp.eq.s32.totalorder %s17, 1
      %p98 = scmp.ne.s32.totalorder %s93, %s95
      %p99 = scmp.eq.s32.totalorder %s17, 0
      %p100 = por %p98, %p99
      %p101 = scmp.ne.s32.totalorder %s93, %s95
      %p102 = scmp.eq.s32.totalorder %s22, 1
      %p103 = por %p101, %p102
      %p104 = scmp.ne.s32.totalorder %s95, %s96
      %p105 = scmp.eq.s32.totalorder %s22, 0
      %p106 = por %p104, %p105
      %p107 = scmp.ne.s32.totalorder %s95, %s96
      %p108 = scmp.eq.s32.totalorder %s23, 1
      %p109 = por %p107, %p108
      %p111 = scmp.ne.s32.totalorder %s96, %s110
      %p112 = scmp.eq.s32.totalorder %s23, 0
      %p113 = por %p111, %p112
      %s114 = ssub.s32 %s17, %s24
      %p115 = scmp.eq.s32.totalorder %s114, 0
      %s117 = sadd.s32 %s116, 1
      %s118 = scalar_select %p115, %s116, %s117
      %p121 = pneg %p115
      %p122 = scmp.eq.s32.totalorder %s17, 1
      %p123 = por %p121, %p122
      %p124 = scmp.ne.s32.totalorder %s116, %s119
      %p125 = scmp.eq.s32.totalorder %s17, 0
      %p126 = por %p124, %p125
      %p127 = scmp.ne.s32.totalorder %s116, %s119
      %p128 = scmp.eq.s32.totalorder %s22, 1
      %p129 = por %p127, %p128
      %p130 = scmp.ne.s32.totalorder %s119, %s120
      %p131 = scmp.eq.s32.totalorder %s22, 0
      %p132 = por %p130, %p131
      %p133 = scmp.ne.s32.totalorder %s119, %s120
      %p134 = scmp.eq.s32.totalorder %s23, 1
      %p135 = por %p133, %p134
      %p137 = scmp.ne.s32.totalorder %s120, %s136
      %p138 = scmp.eq.s32.totalorder %s23, 0
      %p139 = por %p137, %p138
      %p140 = scmp.le.s32.totalorder 1, %s17
      %p141 = scmp.lt.s32.totalorder %s17, 3
      %p142 = pnand %p140, %p141
      %p143 = pneg %p142
      // Predicated region
      $region9: #{tpu_custom_call.1} parent=5 // pred_check
        _
      $region10: #{tpu_custom_call.1} parent=5 // pred_check_branch
        %145 = sbr.rel (%p142) target = $region12
      $region11: #{tpu_custom_call.1} parent=5 // pred_region
        %s146 = ssub.s32 %s17, 1
        // Predicated region
        $region13: #{tpu_custom_call.1} parent=11 // pred_check
          %p147 = pneg %p64
        $region14: #{tpu_custom_call.1} parent=11 // pred_check_branch
          %149 = sbr.rel (%p147) target = $region16
        $region15: #{tpu_custom_call.1} parent=11 // pred_region
          %s151 = ssub.s32 6144, 6144
          %152 = vsyncadd [#allocation6], %s151
          %s153 = sshll.u32 [#allocation5], 4
          %s154 = int_to_ptr.vmem [resolvable:$true] %s153
          %159 = dma.hbm_to_vmem [thread:$0]  %s1, 6144, %s154, [#allocation6], 384, 384, 24
        $region16: #{tpu_custom_call.1} parent=11 // pred_fallthru
          _
        // Predicated region
        $region17: #{tpu_custom_call.1} parent=11 // pred_check
          %p160 = pneg %p85
        $region18: #{tpu_custom_call.1} parent=11 // pred_check_branch
          %162 = sbr.rel (%p160) target = $region20
        $region19: #{tpu_custom_call.1} parent=11 // pred_region
          %s164 = ssub.s32 2048, 2048
          %165 = vsyncadd [#allocation6], %s164
          %s166 = sshll.u32 [#allocation7], 4
          %s167 = int_to_ptr.vmem [resolvable:$true] %s166
          %172 = dma.hbm_to_vmem [thread:$0]  %s2, 2048, %s167, [#allocation6], 128, 128, 8
        $region20: #{tpu_custom_call.1} parent=11 // pred_fallthru
          _
        // Predicated region
        $region21: #{tpu_custom_call.1} parent=11 // pred_check
          %p173 = pneg %p106
        $region22: #{tpu_custom_call.1} parent=11 // pred_check_branch
          %175 = sbr.rel (%p173) target = $region24
        $region23: #{tpu_custom_call.1} parent=11 // pred_region
          _
        $region24: #{tpu_custom_call.1} parent=11 // pred_fallthru
          _
      $region12: #{tpu_custom_call.1} parent=5 // pred_fallthru
        _
      %p176 = scmp.lt.s32.totalorder %s17, 2
      // Predicated region
      $region25: #{tpu_custom_call.1} parent=5 // pred_check
        %p177 = pneg %p176
      $region26: #{tpu_custom_call.1} parent=5 // pred_check_branch
        %179 = sbr.rel (%p177) target = $region28
      $region27: #{tpu_custom_call.1} parent=5 // pred_region
        // Predicated region
        $region29: #{tpu_custom_call.1} parent=27 // pred_check
          %p180 = pneg %p37
        $region30: #{tpu_custom_call.1} parent=27 // pred_check_branch
          %182 = sbr.rel (%p180) target = $region32
        $region31: #{tpu_custom_call.1} parent=27 // pred_region
          %s183 = sand.u32 %s27, 1
          %s184 = scalar_lea.sflag [#allocation3], %s183
          %s185 = sand.u32 %s27, 1
          %s186 = smul.addr %s185, 8
          %s187 = scalar_lea.vmem [#allocation2], %s186
          %s189 = ssub.s32 128, 128
          %190 = vsyncadd %s184, %s189
          %s191 = smul.addr %s17, 128
          %s192 = scalar_lea.hbm %s0, %s191
          %s194 = sshll.u32 %s187, 4
          %s195 = int_to_ptr.vmem [resolvable:$true] %s194
          %197 = dma.hbm_to_vmem [thread:$0]  %s192, 128, %s195, %s184
        $region32: #{tpu_custom_call.1} parent=27 // pred_fallthru
          _
      $region28: #{tpu_custom_call.1} parent=5 // pred_fallthru
        _
      %p198 = scmp.le.s32.totalorder 1, %s17
      %p199 = scmp.lt.s32.totalorder %s17, 3
      %p200 = pnand %p198, %p199
      %p201 = pneg %p200
      // Predicated region
      $region33: #{tpu_custom_call.1} parent=5 // pred_check
        _
      $region34: #{tpu_custom_call.1} parent=5 // pred_check_branch
        %203 = sbr.rel (%p200) target = $region36
      $region35: #{tpu_custom_call.1} parent=5 // pred_region
        %s204 = ssub.s32 %s17, 1
        %s205 = sand.u32 %s30, 1
        %s206 = scalar_lea.sflag [#allocation3], %s205
        %s207 = sand.u32 %s30, 1
        %s208 = smul.addr %s207, 8
        %s209 = scalar_lea.vmem [#allocation2], %s208
        // Predicated region
        $region37: #{tpu_custom_call.1} parent=35 // pred_check
          %p210 = pneg %p43
        $region38: #{tpu_custom_call.1} parent=35 // pred_check_branch
          %212 = sbr.rel (%p210) target = $region40
        $region39: #{tpu_custom_call.1} parent=35 // pred_region
          %213 = dma.done %s206, 128
        $region40: #{tpu_custom_call.1} parent=35 // pred_fallthru
          _
        // Predicated region
        $region41: #{tpu_custom_call.1} parent=35 // pred_check
          %p214 = pneg %p64
        $region42: #{tpu_custom_call.1} parent=35 // pred_check_branch
          %216 = sbr.rel (%p214) target = $region44
        $region43: #{tpu_custom_call.1} parent=35 // pred_region
          %217 = dma.done [#allocation6], 6144
        $region44: #{tpu_custom_call.1} parent=35 // pred_fallthru
          _
        // Predicated region
        $region45: #{tpu_custom_call.1} parent=35 // pred_check
          %p218 = pneg %p85
        $region46: #{tpu_custom_call.1} parent=35 // pred_check_branch
          %220 = sbr.rel (%p218) target = $region48
        $region47: #{tpu_custom_call.1} parent=35 // pred_region
          %221 = dma.done [#allocation6], 2048
        $region48: #{tpu_custom_call.1} parent=35 // pred_fallthru
          _
        %s222 = sand.u32 %s30, 1
        %s223 = scalar_lea.sflag [#allocation3], %s222
        %s224 = sand.u32 %s30, 1
        %s225 = smul.addr %s224, 8
        %s226 = scalar_lea.vmem [#allocation2], %s225
        %p227 = pneg %p43
        %p228 = pneg %p40
        %p229 = pneg %p64
        %p230 = pneg %p61
        %p231 = pneg %p85
        %p232 = pneg %p82
        %p233 = pneg %p106
        %p234 = pneg %p103
        %p235 = pneg %p132
        %p236 = pneg %p129
        %s237 = sand.u32 %s119, 1
        %s238 = scalar_lea.sflag [#allocation4], %s237
        %s239 = sand.u32 %s119, 1
        %s240 = smul.addr %s239, 8
        %s241 = scalar_lea.vmem [#allocation8], %s240
        %v242 = vld [vmem:[#allocation5] sm:$0xff]
        %v243 = vld [vmem:[#allocation5 + $0x8] sm:$0xff]
        %v244 = vld [vmem:[#allocation5 + $0x10] sm:$0xff]
        %v245 = vld [vmem:[#allocation5 + $0x18] sm:$0xff]
        %v246 = vld [vmem:[#allocation5 + $0x20] sm:$0xff]
        %v247 = vld [vmem:[#allocation5 + $0x28] sm:$0xff]
        %v248 = vld [vmem:[#allocation5 + $0x30] sm:$0xff]
        %v249 = vld [vmem:[#allocation5 + $0x38] sm:$0xff]
        %v250 = vld [vmem:[#allocation5 + $0x40] sm:$0xff]
        %v251 = vld [vmem:[#allocation5 + $0x48] sm:$0xff]
        %v252 = vld [vmem:[#allocation5 + $0x50] sm:$0xff]
        %v253 = vld [vmem:[#allocation5 + $0x58] sm:$0xff]
        %v254 = vld [vmem:[#allocation5 + $0x60] sm:$0xff]
        %v255 = vld [vmem:[#allocation5 + $0x68] sm:$0xff]
        %v256 = vld [vmem:[#allocation5 + $0x70] sm:$0xff]
        %v257 = vld [vmem:[#allocation5 + $0x78] sm:$0xff]
        %v258 = vld [vmem:[#allocation5 + $0x80] sm:$0xff]
        %v259 = vld [vmem:[#allocation5 + $0x88] sm:$0xff]
        %v260 = vld [vmem:[#allocation5 + $0x90] sm:$0xff]
        %v261 = vld [vmem:[#allocation5 + $0x98] sm:$0xff]
        %v262 = vld [vmem:[#allocation5 + $0xa0] sm:$0xff]
        %v263 = vld [vmem:[#allocation5 + $0xa8] sm:$0xff]
        %v264 = vld [vmem:[#allocation5 + $0xb0] sm:$0xff]
        %v265 = vld [vmem:[#allocation5 + $0xb8] sm:$0xff]
        %v266 = vld [vmem:[#allocation5 + $0xc0] sm:$0xff]
        %v267 = vld [vmem:[#allocation5 + $0xc8] sm:$0xff]
        %v268 = vld [vmem:[#allocation5 + $0xd0] sm:$0xff]
        %v269 = vld [vmem:[#allocation5 + $0xd8] sm:$0xff]
        %v270 = vld [vmem:[#allocation5 + $0xe0] sm:$0xff]
        %v271 = vld [vmem:[#allocation5 + $0xe8] sm:$0xff]
        %v272 = vld [vmem:[#allocation5 + $0xf0] sm:$0xff]
        %v273 = vld [vmem:[#allocation5 + $0xf8] sm:$0xff]
        %v274 = vld [vmem:[#allocation5 + $0x100] sm:$0xff]
        %v275 = vld [vmem:[#allocation5 + $0x108] sm:$0xff]
        %v276 = vld [vmem:[#allocation5 + $0x110] sm:$0xff]
        %v277 = vld [vmem:[#allocation5 + $0x118] sm:$0xff]
        %v278 = vld [vmem:[#allocation5 + $0x120] sm:$0xff]
        %v279 = vld [vmem:[#allocation5 + $0x128] sm:$0xff]
        %v280 = vld [vmem:[#allocation5 + $0x130] sm:$0xff]
        %v281 = vld [vmem:[#allocation5 + $0x138] sm:$0xff]
        %v282 = vld [vmem:[#allocation5 + $0x140] sm:$0xff]
        %v283 = vld [vmem:[#allocation5 + $0x148] sm:$0xff]
        %v284 = vld [vmem:[#allocation5 + $0x150] sm:$0xff]
        %v285 = vld [vmem:[#allocation5 + $0x158] sm:$0xff]
        %v286 = vld [vmem:[#allocation5 + $0x160] sm:$0xff]
        %v287 = vld [vmem:[#allocation5 + $0x168] sm:$0xff]
        %v288 = vld [vmem:[#allocation5 + $0x170] sm:$0xff]
        %v289 = vld [vmem:[#allocation5 + $0x178] sm:$0xff]
        %v290 = vld [vmem:[#allocation7] sm:$0xff]
        %v291 = vld [vmem:[#allocation7 + $0x8] sm:$0xff]
        %v292 = vld [vmem:[#allocation7 + $0x10] sm:$0xff]
        %v293 = vld [vmem:[#allocation7 + $0x18] sm:$0xff]
        %v294 = vld [vmem:[#allocation7 + $0x20] sm:$0xff]
        %v295 = vld [vmem:[#allocation7 + $0x28] sm:$0xff]
        %v296 = vld [vmem:[#allocation7 + $0x30] sm:$0xff]
        %v297 = vld [vmem:[#allocation7 + $0x38] sm:$0xff]
        %v298 = vld [vmem:[#allocation7 + $0x40] sm:$0xff]
        %v299 = vld [vmem:[#allocation7 + $0x48] sm:$0xff]
        %v300 = vld [vmem:[#allocation7 + $0x50] sm:$0xff]
        %v301 = vld [vmem:[#allocation7 + $0x58] sm:$0xff]
        %v302 = vld [vmem:[#allocation7 + $0x60] sm:$0xff]
        %v303 = vld [vmem:[#allocation7 + $0x68] sm:$0xff]
        %v304 = vld [vmem:[#allocation7 + $0x70] sm:$0xff]
        %v305 = vld [vmem:[#allocation7 + $0x78] sm:$0xff]
        %v306 = vld [vmem:[%s3] sm:$0x1]
        %v307 = vld [vmem:[%s209] sm:$0xff]
        %308 = vmatprep.subr.mxu0 %v243
        %309 = vmatpush1.msra.mxu0 %v242
        %310 = vmatprep.subr.mxu0 %v246
        %311 = vmatpush1.msra.mxu0 %v245
        %312 = vmatprep.subr.mxu0 %v249
        %313 = vmatpush1.msra.mxu0 %v248
        %314 = vmatprep.subr.mxu0 %v252
        %315 = vmatpush1.msra.mxu0 %v251
        %316 = vmatprep.subr.mxu0 %v255
        %317 = vmatpush1.msra.mxu0 %v254
        %318 = vmatprep.subr.mxu0 %v258
        %319 = vmatpush1.msra.mxu0 %v257
        %320 = vmatprep.subr.mxu0 %v261
        %321 = vmatpush1.msra.mxu0 %v260
        %322 = vmatprep.subr.mxu0 %v264
        %323 = vmatpush1.msra.mxu0 %v263
        %324 = vmatprep.subr.mxu0 %v267
        %325 = vmatpush1.msra.mxu0 %v266
        %326 = vmatprep.subr.mxu0 %v270
        %327 = vmatpush1.msra.mxu0 %v269
        %328 = vmatprep.subr.mxu0 %v273
        %329 = vmatpush1.msra.mxu0 %v272
        %330 = vmatprep.subr.mxu0 %v276
        %331 = vmatpush1.msra.mxu0 %v275
        %332 = vmatprep.subr.mxu0 %v279
        %333 = vmatpush1.msra.mxu0 %v278
        %334 = vmatprep.subr.mxu0 %v282
        %335 = vmatpush1.msra.mxu0 %v281
        %336 = vmatprep.subr.mxu0 %v285
        %337 = vmatpush1.msra.mxu0 %v284
        %338 = vmatprep.subr.mxu0 %v288
        %339 = vmatpush1.msra.mxu0 %v287
        %340 = vmatprep.subr.mxu0 0.0
        %341 = vmatpush1.msra.mxu0 0.0
        %342 = vmatprep.subr.mxu0 0.0
        %343 = vmatpush1.msra.mxu0 0.0
        %344 = vmatprep.subr.mxu0 0.0
        %345 = vmatpush1.msra.mxu0 0.0
        %346 = vmatprep.subr.mxu0 0.0
        %347 = vmatpush1.msra.mxu0 0.0
        %348 = vmatprep.subr.mxu0 0.0
        %349 = vmatpush1.msra.mxu0 0.0
        %350 = vmatprep.subr.mxu0 0.0
        %351 = vmatpush1.msra.mxu0 0.0
        %352 = vmatprep.subr.mxu0 0.0
        %353 = vmatpush1.msra.mxu0 0.0
        %354 = vmatprep.subr.mxu0 0.0
        %355 = vmatpush1.msra.mxu0 0.0
        %356 = vmatprep.subr.mxu0 0.0
        %357 = vmatpush1.msra.mxu0 0.0
        %358 = vmatprep.subr.mxu0 0.0
        %359 = vmatpush1.msra.mxu0 0.0
        %360 = vmatprep.subr.mxu0 0.0
        %361 = vmatpush1.msra.mxu0 0.0
        %362 = vmatprep.subr.mxu0 0.0
        %363 = vmatpush1.msra.mxu0 0.0
        %364 = vmatprep.subr.mxu0 0.0
        %365 = vmatpush1.msra.mxu0 0.0
        %366 = vmatprep.subr.mxu0 0.0
        %367 = vmatpush1.msra.mxu0 0.0
        %368 = vmatprep.subr.mxu0 0.0
        %369 = vmatpush1.msra.mxu0 0.0
        %370 = vmatprep.subr.mxu0 0.0
        %371 = vmatpush1.msra.mxu0 0.0
        %372 = vmatprep.mubr.f32.mxu0 0.0
        %373 = vmatmul.mubr.f32.gmra.mrb[0].mxu0 %v307
        %v374 = vpop.f32.mrb[0].mxu0
        %v375 = vadd.f32 0.0, %v374
        %v376 = vpop.f32.mrb[0].mxu0
        %v377 = vadd.f32 0.0, %v376
        %378 = vdwg.mxu0
        %379 = vmatprep.subr.mxu0 0.0
        %380 = vmatpush1.msra.mxu0 %v244
        %381 = vmatprep.subr.mxu0 0.0
        %382 = vmatpush1.msra.mxu0 %v247
        %383 = vmatprep.subr.mxu0 0.0
        %384 = vmatpush1.msra.mxu0 %v250
        %385 = vmatprep.subr.mxu0 0.0
        %386 = vmatpush1.msra.mxu0 %v253
        %387 = vmatprep.subr.mxu0 0.0
        %388 = vmatpush1.msra.mxu0 %v256
        %389 = vmatprep.subr.mxu0 0.0
        %390 = vmatpush1.msra.mxu0 %v259
        %391 = vmatprep.subr.mxu0 0.0
        %392 = vmatpush1.msra.mxu0 %v262
        %393 = vmatprep.subr.mxu0 0.0
        %394 = vmatpush1.msra.mxu0 %v265
        %395 = vmatprep.subr.mxu0 0.0
        %396 = vmatpush1.msra.mxu0 %v268
        %397 = vmatprep.subr.mxu0 0.0
        %398 = vmatpush1.msra.mxu0 %v271
        %399 = vmatprep.subr.mxu0 0.0
        %400 = vmatpush1.msra.mxu0 %v274
        %401 = vmatprep.subr.mxu0 0.0
        %402 = vmatpush1.msra.mxu0 %v277
        %403 = vmatprep.subr.mxu0 0.0
        %404 = vmatpush1.msra.mxu0 %v280
        %405 = vmatprep.subr.mxu0 0.0
        %406 = vmatpush1.msra.mxu0 %v283
        %407 = vmatprep.subr.mxu0 0.0
        %408 = vmatpush1.msra.mxu0 %v286
        %409 = vmatprep.subr.mxu0 0.0
        %410 = vmatpush1.msra.mxu0 %v289
        %411 = vmatprep.subr.mxu0 0.0
        %412 = vmatpush1.msra.mxu0 0.0
        %413 = vmatprep.subr.mxu0 0.0
        %414 = vmatpush1.msra.mxu0 0.0
        %415 = vmatprep.subr.mxu0 0.0
        %416 = vmatpush1.msra.mxu0 0.0
        %417 = vmatprep.subr.mxu0 0.0
        %418 = vmatpush1.msra.mxu0 0.0
        %419 = vmatprep.subr.mxu0 0.0
        %420 = vmatpush1.msra.mxu0 0.0
        %421 = vmatprep.subr.mxu0 0.0
        %422 = vmatpush1.msra.mxu0 0.0
        %423 = vmatprep.subr.mxu0 0.0
        %424 = vmatpush1.msra.mxu0 0.0
        %425 = vmatprep.subr.mxu0 0.0
        %426 = vmatpush1.msra.mxu0 0.0
        %427 = vmatprep.subr.mxu0 0.0
        %428 = vmatpush1.msra.mxu0 0.0
        %429 = vmatprep.subr.mxu0 0.0
        %430 = vmatpush1.msra.mxu0 0.0
        %431 = vmatprep.subr.mxu0 0.0
        %432 = vmatpush1.msra.mxu0 0.0
        %433 = vmatprep.subr.mxu0 0.0
        %434 = vmatpush1.msra.mxu0 0.0
        %435 = vmatprep.subr.mxu0 0.0
        %436 = vmatpush1.msra.mxu0 0.0
        %437 = vmatprep.subr.mxu0 0.0
        %438 = vmatpush1.msra.mxu0 0.0
        %439 = vmatprep.subr.mxu0 0.0
        %440 = vmatpush1.msra.mxu0 0.0
        %441 = vmatprep.subr.mxu0 0.0
        %442 = vmatpush1.msra.mxu0 0.0
        %443 = vmatprep.mubr.f32.mxu0 0.0
        %444 = vmatmul.mubr.f32.gmra.mrb[0].mxu0 %v307
        %v445 = vpop.f32.mrb[0].mxu0
        %v446 = vadd.f32 0.0, %v445
        %v447 = vpop.f32.mrb[0].mxu0
        %448 = vdwg.mxu0
        %v449 = vmul.f32 %v375, 0.088388346
        %vm450 = vcmask 130048
        %v452 = vsel %vm450, %v449, 0
        %v455 = vsel %vm450, %v377, 0
        %457 = vmatprep.subr.mxu0 0.0
        %458 = vmatpush1.xpose.msra.mxu0 %v455
        %459 = vmatprep.subr.mxu0 0.0
        %460 = vmatpush1.xpose.msra.mxu0 0.0
        %461 = vmatprep.subr.mxu0 0.0
        %462 = vmatpush1.xpose.msra.mxu0 0.0
        %463 = vmatprep.subr.mxu0 0.0
        %464 = vmatpush1.xpose.msra.mxu0 0.0
        %465 = vmatprep.subr.mxu0 0.0
        %466 = vmatpush1.xpose.msra.mxu0 0.0
        %467 = vmatprep.subr.mxu0 0.0
        %468 = vmatpush1.xpose.msra.mxu0 0.0
        %469 = vmatprep.subr.mxu0 0.0
        %470 = vmatpush1.xpose.msra.mxu0 0.0
        %471 = vmatprep.subr.mxu0 0.0
        %472 = vmatpush1.xpose.msra.mxu0 0.0
        %473 = vmatprep.subr.mxu0 0.0
        %474 = vmatpush1.xpose.msra.mxu0 0.0
        %475 = vmatprep.subr.mxu0 0.0
        %476 = vmatpush1.xpose.msra.mxu0 0.0
        %477 = vmatprep.subr.mxu0 0.0
        %478 = vmatpush1.xpose.msra.mxu0 0.0
        %479 = vmatprep.subr.mxu0 0.0
        %480 = vmatpush1.xpose.msra.mxu0 0.0
        %481 = vmatprep.subr.mxu0 0.0
        %482 = vmatpush1.xpose.msra.mxu0 0.0
        %483 = vmatprep.subr.mxu0 0.0
        %484 = vmatpush1.xpose.msra.mxu0 0.0
        %485 = vmatprep.subr.mxu0 0.0
        %486 = vmatpush1.xpose.msra.mxu0 0.0
        %487 = vmatprep.subr.mxu0 0.0
        %488 = vmatpush1.xpose.msra.mxu0 0.0
        %489 = vmatprep.subr.mxu0 0.0
        %490 = vmatpush1.xpose.msra.mxu0 0.0
        %491 = vmatprep.subr.mxu0 0.0
        %492 = vmatpush1.xpose.msra.mxu0 0.0
        %493 = vmatprep.subr.mxu0 0.0
        %494 = vmatpush1.xpose.msra.mxu0 0.0
        %495 = vmatprep.subr.mxu0 0.0
        %496 = vmatpush1.xpose.msra.mxu0 0.0
        %497 = vmatprep.subr.mxu0 0.0
        %498 = vmatpush1.xpose.msra.mxu0 0.0
        %499 = vmatprep.subr.mxu0 0.0
        %500 = vmatpush1.xpose.msra.mxu0 0.0
        %501 = vmatprep.subr.mxu0 0.0
        %502 = vmatpush1.xpose.msra.mxu0 0.0
        %503 = vmatprep.subr.mxu0 0.0
        %504 = vmatpush1.xpose.msra.mxu0 0.0
        %505 = vmatprep.subr.mxu0 0.0
        %506 = vmatpush1.xpose.msra.mxu0 0.0
        %507 = vmatprep.subr.mxu0 0.0
        %508 = vmatpush1.xpose.msra.mxu0 0.0
        %509 = vmatprep.subr.mxu0 0.0
        %510 = vmatpush1.xpose.msra.mxu0 0.0
        %511 = vmatprep.subr.mxu0 0.0
        %512 = vmatpush1.xpose.msra.mxu0 0.0
        %513 = vmatprep.subr.mxu0 0.0
        %514 = vmatpush1.xpose.msra.mxu0 0.0
        %515 = vmatprep.subr.mxu0 0.0
        %516 = vmatpush1.xpose.msra.mxu0 0.0
        %517 = vmatprep.subr.mxu0 0.0
        %518 = vmatpush1.xpose.msra.mxu0 0.0
        %519 = vmatprep.subr.mxu0 0.0
        %520 = vmatpush1.xpose.msra.mxu0 0.0
        %521 = vmatprep.mubr.f32.mxu0 0.0
        %522 = vmatmul.mubr.f32.gmra.mrb[0].mxu0 %v452
        %v523 = vpop.f32.mrb[0].mxu0
        %v524 = vadd.f32 0.0, %v523
        %v525 = vpop.f32.mrb[0].mxu0
        %526 = vdwg.mxu0
        %vm527 = vcmask 64512
        %v528 = vsel %vm527, %v524, -inf
        %529 = vmax.xlane.f32.xlu0 %v528
        %v530 = vpop.xlane.xlu0 %529
        %v531 = vsub.f32 %v524, %v530
        %v532 = vmul.f32 %v531, 1.442695
        %v533 = vpow.pop %v532
        %v534 = vsel %vm527, %v533, 0.0
        %535 = vadd.xlane.f32.xlu0 %v534
        %v536 = vpop.xlane.xlu0 %535
        %v538 = vsel %vm527, %v533, 0
        %540 = vmatprep.subr.mxu0 0.0
        %541 = vmatpush1.msra.mxu0 %v446
        %542 = vmatprep.subr.mxu0 0.0
        %543 = vmatpush1.msra.mxu0 0.0
        %544 = vmatprep.subr.mxu0 0.0
        %545 = vmatpush1.msra.mxu0 0.0
        %546 = vmatprep.subr.mxu0 0.0
        %547 = vmatpush1.msra.mxu0 0.0
        %548 = vmatprep.subr.mxu0 0.0
        %549 = vmatpush1.msra.mxu0 0.0
        %550 = vmatprep.subr.mxu0 0.0
        %551 = vmatpush1.msra.mxu0 0.0
        %552 = vmatprep.subr.mxu0 0.0
        %553 = vmatpush1.msra.mxu0 0.0
        %554 = vmatprep.subr.mxu0 0.0
        %555 = vmatpush1.msra.mxu0 0.0
        %556 = vmatprep.subr.mxu0 0.0
        %557 = vmatpush1.msra.mxu0 0.0
        %558 = vmatprep.subr.mxu0 0.0
        %559 = vmatpush1.msra.mxu0 0.0
        %560 = vmatprep.subr.mxu0 0.0
        %561 = vmatpush1.msra.mxu0 0.0
        %562 = vmatprep.subr.mxu0 0.0
        %563 = vmatpush1.msra.mxu0 0.0
        %564 = vmatprep.subr.mxu0 0.0
        %565 = vmatpush1.msra.mxu0 0.0
        %566 = vmatprep.subr.mxu0 0.0
        %567 = vmatpush1.msra.mxu0 0.0
        %568 = vmatprep.subr.mxu0 0.0
        %569 = vmatpush1.msra.mxu0 0.0
        %570 = vmatprep.subr.mxu0 0.0
        %571 = vmatpush1.msra.mxu0 0.0
        %572 = vmatprep.subr.mxu0 0.0
        %573 = vmatpush1.msra.mxu0 0.0
        %574 = vmatprep.subr.mxu0 0.0
        %575 = vmatpush1.msra.mxu0 0.0
        %576 = vmatprep.subr.mxu0 0.0
        %577 = vmatpush1.msra.mxu0 0.0
        %578 = vmatprep.subr.mxu0 0.0
        %579 = vmatpush1.msra.mxu0 0.0
        %580 = vmatprep.subr.mxu0 0.0
        %581 = vmatpush1.msra.mxu0 0.0
        %582 = vmatprep.subr.mxu0 0.0
        %583 = vmatpush1.msra.mxu0 0.0
        %584 = vmatprep.subr.mxu0 0.0
        %585 = vmatpush1.msra.mxu0 0.0
        %586 = vmatprep.subr.mxu0 0.0
        %587 = vmatpush1.msra.mxu0 0.0
        %588 = vmatprep.subr.mxu0 0.0
        %589 = vmatpush1.msra.mxu0 0.0
        %590 = vmatprep.subr.mxu0 0.0
        %591 = vmatpush1.msra.mxu0 0.0
        %592 = vmatprep.subr.mxu0 0.0
        %593 = vmatpush1.msra.mxu0 0.0
        %594 = vmatprep.subr.mxu0 0.0
        %595 = vmatpush1.msra.mxu0 0.0
        %596 = vmatprep.subr.mxu0 0.0
        %597 = vmatpush1.msra.mxu0 0.0
        %598 = vmatprep.subr.mxu0 0.0
        %599 = vmatpush1.msra.mxu0 0.0
        %600 = vmatprep.subr.mxu0 0.0
        %601 = vmatpush1.msra.mxu0 0.0
        %602 = vmatprep.subr.mxu0 0.0
        %603 = vmatpush1.msra.mxu0 0.0
        %604 = vmatprep.mubr.f32.mxu0 0.0
        %605 = vmatmul.mubr.f32.gmra.mrb[0].mxu0 %v538
        %v606 = vpop.f32.mrb[0].mxu0
        %v607 = vadd.f32 0.0, %v606
        %v608 = vpop.f32.mrb[0].mxu0
        %609 = vdwg.mxu0
        %v610 = vrcp.pop %v536
        %v611 = vmul.f32 %v607, %v610
        %612 = vrot.lane.b32.xlu0 %v449, 112
        %v613 = vpop.permute.xlu0 %612
        %614 = vrot.lane.b32.xlu0 %v377, 112
        %v615 = vpop.permute.xlu0 %614
        %v616 = vsel %vm450, %v613, 0
        %v618 = vsel %vm450, %v615, 0
        %620 = vmatprep.subr.mxu0 0.0
        %621 = vmatpush1.xpose.msra.mxu0 %v618
        %622 = vmatprep.subr.mxu0 0.0
        %623 = vmatpush1.xpose.msra.mxu0 0.0
        %624 = vmatprep.subr.mxu0 0.0
        %625 = vmatpush1.xpose.msra.mxu0 0.0
        %626 = vmatprep.subr.mxu0 0.0
        %627 = vmatpush1.xpose.msra.mxu0 0.0
        %628 = vmatprep.subr.mxu0 0.0
        %629 = vmatpush1.xpose.msra.mxu0 0.0
        %630 = vmatprep.subr.mxu0 0.0
        %631 = vmatpush1.xpose.msra.mxu0 0.0
        %632 = vmatprep.subr.mxu0 0.0
        %633 = vmatpush1.xpose.msra.mxu0 0.0
        %634 = vmatprep.subr.mxu0 0.0
        %635 = vmatpush1.xpose.msra.mxu0 0.0
        %636 = vmatprep.subr.mxu0 0.0
        %637 = vmatpush1.xpose.msra.mxu0 0.0
        %638 = vmatprep.subr.mxu0 0.0
        %639 = vmatpush1.xpose.msra.mxu0 0.0
        %640 = vmatprep.subr.mxu0 0.0
        %641 = vmatpush1.xpose.msra.mxu0 0.0
        %642 = vmatprep.subr.mxu0 0.0
        %643 = vmatpush1.xpose.msra.mxu0 0.0
        %644 = vmatprep.subr.mxu0 0.0
        %645 = vmatpush1.xpose.msra.mxu0 0.0
        %646 = vmatprep.subr.mxu0 0.0
        %647 = vmatpush1.xpose.msra.mxu0 0.0
        %648 = vmatprep.subr.mxu0 0.0
        %649 = vmatpush1.xpose.msra.mxu0 0.0
        %650 = vmatprep.subr.mxu0 0.0
        %651 = vmatpush1.xpose.msra.mxu0 0.0
        %652 = vmatprep.subr.mxu0 0.0
        %653 = vmatpush1.xpose.msra.mxu0 0.0
        %654 = vmatprep.subr.mxu0 0.0
        %655 = vmatpush1.xpose.msra.mxu0 0.0
        %656 = vmatprep.subr.mxu0 0.0
        %657 = vmatpush1.xpose.msra.mxu0 0.0
        %658 = vmatprep.subr.mxu0 0.0
        %659 = vmatpush1.xpose.msra.mxu0 0.0
        %660 = vmatprep.subr.mxu0 0.0
        %661 = vmatpush1.xpose.msra.mxu0 0.0
        %662 = vmatprep.subr.mxu0 0.0
        %663 = vmatpush1.xpose.msra.mxu0 0.0
        %664 = vmatprep.subr.mxu0 0.0
        %665 = vmatpush1.xpose.msra.mxu0 0.0
        %666 = vmatprep.subr.mxu0 0.0
        %667 = vmatpush1.xpose.msra.mxu0 0.0
        %668 = vmatprep.subr.mxu0 0.0
        %669 = vmatpush1.xpose.msra.mxu0 0.0
        %670 = vmatprep.subr.mxu0 0.0
        %671 = vmatpush1.xpose.msra.mxu0 0.0
        %672 = vmatprep.subr.mxu0 0.0
        %673 = vmatpush1.xpose.msra.mxu0 0.0
        %674 = vmatprep.subr.mxu0 0.0
        %675 = vmatpush1.xpose.msra.mxu0 0.0
        %676 = vmatprep.subr.mxu0 0.0
        %677 = vmatpush1.xpose.msra.mxu0 0.0
        %678 = vmatprep.subr.mxu0 0.0
        %679 = vmatpush1.xpose.msra.mxu0 0.0
        %680 = vmatprep.subr.mxu0 0.0
        %681 = vmatpush1.xpose.msra.mxu0 0.0
        %682 = vmatprep.subr.mxu0 0.0
        %683 = vmatpush1.xpose.msra.mxu0 0.0
        %684 = vmatprep.mubr.f32.mxu0 0.0
        %685 = vmatmul.mubr.f32.gmra.mrb[0].mxu0 %v616
        %v686 = vpop.f32.mrb[0].mxu0
        %v687 = vadd.f32 0.0, %v686
        %v688 = vpop.f32.mrb[0].mxu0
        %689 = vdwg.mxu0
        %v690 = vsel %vm527, %v687, -inf
        %691 = vmax.xlane.f32.xlu0 %v690
        %v692 = vpop.xlane.xlu0 %691
        %v693 = vsub.f32 %v687, %v692
        %v694 = vmul.f32 %v693, 1.442695
        %v695 = vpow.pop %v694
        %v696 = vsel %vm527, %v695, 0.0
        %697 = vadd.xlane.f32.xlu0 %v696
        %v698 = vpop.xlane.xlu0 %697
        %700 = vrot.lane.b32.xlu0 %v446, 112
        %v701 = vpop.permute.xlu0 %700
        %v704 = vsel %vm527, %v695, 0
        %706 = vmatprep.subr.mxu0 0.0
        %707 = vmatpush1.msra.mxu0 %v701
        %708 = vmatprep.subr.mxu0 0.0
        %709 = vmatpush1.msra.mxu0 0.0
        %710 = vmatprep.subr.mxu0 0.0
        %711 = vmatpush1.msra.mxu0 0.0
        %712 = vmatprep.subr.mxu0 0.0
        %713 = vmatpush1.msra.mxu0 0.0
        %714 = vmatprep.subr.mxu0 0.0
        %715 = vmatpush1.msra.mxu0 0.0
        %716 = vmatprep.subr.mxu0 0.0
        %717 = vmatpush1.msra.mxu0 0.0
        %718 = vmatprep.subr.mxu0 0.0
        %719 = vmatpush1.msra.mxu0 0.0
        %720 = vmatprep.subr.mxu0 0.0
        %721 = vmatpush1.msra.mxu0 0.0
        %722 = vmatprep.subr.mxu0 0.0
        %723 = vmatpush1.msra.mxu0 0.0
        %724 = vmatprep.subr.mxu0 0.0
        %725 = vmatpush1.msra.mxu0 0.0
        %726 = vmatprep.subr.mxu0 0.0
        %727 = vmatpush1.msra.mxu0 0.0
        %728 = vmatprep.subr.mxu0 0.0
        %729 = vmatpush1.msra.mxu0 0.0
        %730 = vmatprep.subr.mxu0 0.0
        %731 = vmatpush1.msra.mxu0 0.0
        %732 = vmatprep.subr.mxu0 0.0
        %733 = vmatpush1.msra.mxu0 0.0
        %734 = vmatprep.subr.mxu0 0.0
        %735 = vmatpush1.msra.mxu0 0.0
        %736 = vmatprep.subr.mxu0 0.0
        %737 = vmatpush1.msra.mxu0 0.0
        %738 = vmatprep.subr.mxu0 0.0
        %739 = vmatpush1.msra.mxu0 0.0
        %740 = vmatprep.subr.mxu0 0.0
        %741 = vmatpush1.msra.mxu0 0.0
        %742 = vmatprep.subr.mxu0 0.0
        %743 = vmatpush1.msra.mxu0 0.0
        %744 = vmatprep.subr.mxu0 0.0
        %745 = vmatpush1.msra.mxu0 0.0
        %746 = vmatprep.subr.mxu0 0.0
        %747 = vmatpush1.msra.mxu0 0.0
        %748 = vmatprep.subr.mxu0 0.0
        %749 = vmatpush1.msra.mxu0 0.0
        %750 = vmatprep.subr.mxu0 0.0
        %751 = vmatpush1.msra.mxu0 0.0
        %752 = vmatprep.subr.mxu0 0.0
        %753 = vmatpush1.msra.mxu0 0.0
        %754 = vmatprep.subr.mxu0 0.0
        %755 = vmatpush1.msra.mxu0 0.0
        %756 = vmatprep.subr.mxu0 0.0
        %757 = vmatpush1.msra.mxu0 0.0
        %758 = vmatprep.subr.mxu0 0.0
        %759 = vmatpush1.msra.mxu0 0.0
        %760 = vmatprep.subr.mxu0 0.0
        %761 = vmatpush1.msra.mxu0 0.0
        %762 = vmatprep.subr.mxu0 0.0
        %763 = vmatpush1.msra.mxu0 0.0
        %764 = vmatprep.subr.mxu0 0.0
        %765 = vmatpush1.msra.mxu0 0.0
        %766 = vmatprep.subr.mxu0 0.0
        %767 = vmatpush1.msra.mxu0 0.0
        %768 = vmatprep.subr.mxu0 0.0
        %769 = vmatpush1.msra.mxu0 0.0
        %770 = vmatprep.mubr.f32.mxu0 0.0
        %771 = vmatmul.mubr.f32.gmra.mrb[0].mxu0 %v704
        %v772 = vpop.f32.mrb[0].mxu0
        %v773 = vadd.f32 0.0, %v772
        %v774 = vpop.f32.mrb[0].mxu0
        %775 = vdwg.mxu0
        %v776 = vrcp.pop %v698
        %v777 = vmul.f32 %v773, %v776
        %778 = vrot.lane.b32.xlu0 %v449, 96
        %v779 = vpop.permute.xlu0 %778
        %780 = vrot.lane.b32.xlu0 %v377, 96
        %v781 = vpop.permute.xlu0 %780
        %v782 = vsel %vm450, %v779, 0
        %v784 = vsel %vm450, %v781, 0
        %786 = vmatprep.subr.mxu0 0.0
        %787 = vmatpush1.xpose.msra.mxu0 %v784
        %788 = vmatprep.subr.mxu0 0.0
        %789 = vmatpush1.xpose.msra.mxu0 0.0
        %790 = vmatprep.subr.mxu0 0.0
        %791 = vmatpush1.xpose.msra.mxu0 0.0
        %792 = vmatprep.subr.mxu0 0.0
        %793 = vmatpush1.xpose.msra.mxu0 0.0
        %794 = vmatprep.subr.mxu0 0.0
        %795 = vmatpush1.xpose.msra.mxu0 0.0
        %796 = vmatprep.subr.mxu0 0.0
        %797 = vmatpush1.xpose.msra.mxu0 0.0
        %798 = vmatprep.subr.mxu0 0.0
        %799 = vmatpush1.xpose.msra.mxu0 0.0
        %800 = vmatprep.subr.mxu0 0.0
        %801 = vmatpush1.xpose.msra.mxu0 0.0
        %802 = vmatprep.subr.mxu0 0.0
        %803 = vmatpush1.xpose.msra.mxu0 0.0
        %804 = vmatprep.subr.mxu0 0.0
        %805 = vmatpush1.xpose.msra.mxu0 0.0
        %806 = vmatprep.subr.mxu0 0.0
        %807 = vmatpush1.xpose.msra.mxu0 0.0
        %808 = vmatprep.subr.mxu0 0.0
        %809 = vmatpush1.xpose.msra.mxu0 0.0
        %810 = vmatprep.subr.mxu0 0.0
        %811 = vmatpush1.xpose.msra.mxu0 0.0
        %812 = vmatprep.subr.mxu0 0.0
        %813 = vmatpush1.xpose.msra.mxu0 0.0
        %814 = vmatprep.subr.mxu0 0.0
        %815 = vmatpush1.xpose.msra.mxu0 0.0
        %816 = vmatprep.subr.mxu0 0.0
        %817 = vmatpush1.xpose.msra.mxu0 0.0
        %818 = vmatprep.subr.mxu0 0.0
        %819 = vmatpush1.xpose.msra.mxu0 0.0
        %820 = vmatprep.subr.mxu0 0.0
        %821 = vmatpush1.xpose.msra.mxu0 0.0
        %822 = vmatprep.subr.mxu0 0.0
        %823 = vmatpush1.xpose.msra.mxu0 0.0
        %824 = vmatprep.subr.mxu0 0.0
        %825 = vmatpush1.xpose.msra.mxu0 0.0
        %826 = vmatprep.subr.mxu0 0.0
        %827 = vmatpush1.xpose.msra.mxu0 0.0
        %828 = vmatprep.subr.mxu0 0.0
        %829 = vmatpush1.xpose.msra.mxu0 0.0
        %830 = vmatprep.subr.mxu0 0.0
        %831 = vmatpush1.xpose.msra.mxu0 0.0
        %832 = vmatprep.subr.mxu0 0.0
        %833 = vmatpush1.xpose.msra.mxu0 0.0
        %834 = vmatprep.subr.mxu0 0.0
        %835 = vmatpush1.xpose.msra.mxu0 0.0
        %836 = vmatprep.subr.mxu0 0.0
        %837 = vmatpush1.xpose.msra.mxu0 0.0
        %838 = vmatprep.subr.mxu0 0.0
        %839 = vmatpush1.xpose.msra.mxu0 0.0
        %840 = vmatprep.subr.mxu0 0.0
        %841 = vmatpush1.xpose.msra.mxu0 0.0
        %842 = vmatprep.subr.mxu0 0.0
        %843 = vmatpush1.xpose.msra.mxu0 0.0
        %844 = vmatprep.subr.mxu0 0.0
        %845 = vmatpush1.xpose.msra.mxu0 0.0
        %846 = vmatprep.subr.mxu0 0.0
        %847 = vmatpush1.xpose.msra.mxu0 0.0
        %848 = vmatprep.subr.mxu0 0.0
        %849 = vmatpush1.xpose.msra.mxu0 0.0
        %850 = vmatprep.mubr.f32.mxu0 0.0
        %851 = vmatmul.mubr.f32.gmra.mrb[0].mxu0 %v782
        %v852 = vpop.f32.mrb[0].mxu0
        %v853 = vadd.f32 0.0, %v852
        %v854 = vpop.f32.mrb[0].mxu0
        %855 = vdwg.mxu0
        %v856 = vsel %vm527, %v853, -inf
        %857 = vmax.xlane.f32.xlu0 %v856
        %v858 = vpop.xlane.xlu0 %857
        %v859 = vsub.f32 %v853, %v858
        %v860 = vmul.f32 %v859, 1.442695
        %v861 = vpow.pop %v860
        %v862 = vsel %vm527, %v861, 0.0
        %863 = vadd.xlane.f32.xlu0 %v862
        %v864 = vpop.xlane.xlu0 %863
        %865 = vrot.lane.b32.xlu0 %v446, 96
        %v866 = vpop.permute.xlu0 %865
        %v869 = vsel %vm527, %v861, 0
        %871 = vmatprep.subr.mxu0 0.0
        %872 = vmatpush1.msra.mxu0 %v866
        %873 = vmatprep.subr.mxu0 0.0
        %874 = vmatpush1.msra.mxu0 0.0
        %875 = vmatprep.subr.mxu0 0.0
        %876 = vmatpush1.msra.mxu0 0.0
        %877 = vmatprep.subr.mxu0 0.0
        %878 = vmatpush1.msra.mxu0 0.0
        %879 = vmatprep.subr.mxu0 0.0
        %880 = vmatpush1.msra.mxu0 0.0
        %881 = vmatprep.subr.mxu0 0.0
        %882 = vmatpush1.msra.mxu0 0.0
        %883 = vmatprep.subr.mxu0 0.0
        %884 = vmatpush1.msra.mxu0 0.0
        %885 = vmatprep.subr.mxu0 0.0
        %886 = vmatpush1.msra.mxu0 0.0
        %887 = vmatprep.subr.mxu0 0.0
        %888 = vmatpush1.msra.mxu0 0.0
        %889 = vmatprep.subr.mxu0 0.0
        %890 = vmatpush1.msra.mxu0 0.0
        %891 = vmatprep.subr.mxu0 0.0
        %892 = vmatpush1.msra.mxu0 0.0
        %893 = vmatprep.subr.mxu0 0.0
        %894 = vmatpush1.msra.mxu0 0.0
        %895 = vmatprep.subr.mxu0 0.0
        %896 = vmatpush1.msra.mxu0 0.0
        %897 = vmatprep.subr.mxu0 0.0
        %898 = vmatpush1.msra.mxu0 0.0
        %899 = vmatprep.subr.mxu0 0.0
        %900 = vmatpush1.msra.mxu0 0.0
        %901 = vmatprep.subr.mxu0 0.0
        %902 = vmatpush1.msra.mxu0 0.0
        %903 = vmatprep.subr.mxu0 0.0
        %904 = vmatpush1.msra.mxu0 0.0
        %905 = vmatprep.subr.mxu0 0.0
        %906 = vmatpush1.msra.mxu0 0.0
        %907 = vmatprep.subr.mxu0 0.0
        %908 = vmatpush1.msra.mxu0 0.0
        %909 = vmatprep.subr.mxu0 0.0
        %910 = vmatpush1.msra.mxu0 0.0
        %911 = vmatprep.subr.mxu0 0.0
        %912 = vmatpush1.msra.mxu0 0.0
        %913 = vmatprep.subr.mxu0 0.0
        %914 = vmatpush1.msra.mxu0 0.0
        %915 = vmatprep.subr.mxu0 0.0
        %916 = vmatpush1.msra.mxu0 0.0
        %917 = vmatprep.subr.mxu0 0.0
        %918 = vmatpush1.msra.mxu0 0.0
        %919 = vmatprep.subr.mxu0 0.0
        %920 = vmatpush1.msra.mxu0 0.0
        %921 = vmatprep.subr.mxu0 0.0
        %922 = vmatpush1.msra.mxu0 0.0
        %923 = vmatprep.subr.mxu0 0.0
        %924 = vmatpush1.msra.mxu0 0.0
        %925 = vmatprep.subr.mxu0 0.0
        %926 = vmatpush1.msra.mxu0 0.0
        %927 = vmatprep.subr.mxu0 0.0
        %928 = vmatpush1.msra.mxu0 0.0
        %929 = vmatprep.subr.mxu0 0.0
        %930 = vmatpush1.msra.mxu0 0.0
        %931 = vmatprep.subr.mxu0 0.0
        %932 = vmatpush1.msra.mxu0 0.0
        %933 = vmatprep.subr.mxu0 0.0
        %934 = vmatpush1.msra.mxu0 0.0
        %935 = vmatprep.mubr.f32.mxu0 0.0
        %936 = vmatmul.mubr.f32.gmra.mrb[0].mxu0 %v869
        %v937 = vpop.f32.mrb[0].mxu0
        %v938 = vadd.f32 0.0, %v937
        %v939 = vpop.f32.mrb[0].mxu0
        %940 = vdwg.mxu0
        %v941 = vrcp.pop %v864
        %v942 = vmul.f32 %v938, %v941
        %943 = vrot.lane.b32.xlu0 %v449, 80
        %v944 = vpop.permute.xlu0 %943
        %945 = vrot.lane.b32.xlu0 %v377, 80
        %v946 = vpop.permute.xlu0 %945
        %v947 = vsel %vm450, %v944, 0
        %v949 = vsel %vm450, %v946, 0
        %951 = vmatprep.subr.mxu0 0.0
        %952 = vmatpush1.xpose.msra.mxu0 %v949
        %953 = vmatprep.subr.mxu0 0.0
        %954 = vmatpush1.xpose.msra.mxu0 0.0
        %955 = vmatprep.subr.mxu0 0.0
        %956 = vmatpush1.xpose.msra.mxu0 0.0
        %957 = vmatprep.subr.mxu0 0.0
        %958 = vmatpush1.xpose.msra.mxu0 0.0
        %959 = vmatprep.subr.mxu0 0.0
        %960 = vmatpush1.xpose.msra.mxu0 0.0
        %961 = vmatprep.subr.mxu0 0.0
        %962 = vmatpush1.xpose.msra.mxu0 0.0
        %963 = vmatprep.subr.mxu0 0.0
        %964 = vmatpush1.xpose.msra.mxu0 0.0
        %965 = vmatprep.subr.mxu0 0.0
        %966 = vmatpush1.xpose.msra.mxu0 0.0
        %967 = vmatprep.subr.mxu0 0.0
        %968 = vmatpush1.xpose.msra.mxu0 0.0
        %969 = vmatprep.subr.mxu0 0.0
        %970 = vmatpush1.xpose.msra.mxu0 0.0
        %971 = vmatprep.subr.mxu0 0.0
        %972 = vmatpush1.xpose.msra.mxu0 0.0
        %973 = vmatprep.subr.mxu0 0.0
        %974 = vmatpush1.xpose.msra.mxu0 0.0
        %975 = vmatprep.subr.mxu0 0.0
        %976 = vmatpush1.xpose.msra.mxu0 0.0
        %977 = vmatprep.subr.mxu0 0.0
        %978 = vmatpush1.xpose.msra.mxu0 0.0
        %979 = vmatprep.subr.mxu0 0.0
        %980 = vmatpush1.xpose.msra.mxu0 0.0
        %981 = vmatprep.subr.mxu0 0.0
        %982 = vmatpush1.xpose.msra.mxu0 0.0
        %983 = vmatprep.subr.mxu0 0.0
        %984 = vmatpush1.xpose.msra.mxu0 0.0
        %985 = vmatprep.subr.mxu0 0.0
        %986 = vmatpush1.xpose.msra.mxu0 0.0
        %987 = vmatprep.subr.mxu0 0.0
        %988 = vmatpush1.xpose.msra.mxu0 0.0
        %989 = vmatprep.subr.mxu0 0.0
        %990 = vmatpush1.xpose.msra.mxu0 0.0
        %991 = vmatprep.subr.mxu0 0.0
        %992 = vmatpush1.xpose.msra.mxu0 0.0
        %993 = vmatprep.subr.mxu0 0.0
        %994 = vmatpush1.xpose.msra.mxu0 0.0
        %995 = vmatprep.subr.mxu0 0.0
        %996 = vmatpush1.xpose.msra.mxu0 0.0
        %997 = vmatprep.subr.mxu0 0.0
        %998 = vmatpush1.xpose.msra.mxu0 0.0
        %999 = vmatprep.subr.mxu0 0.0
        %1000 = vmatpush1.xpose.msra.mxu0 0.0
        %1001 = vmatprep.subr.mxu0 0.0
        %1002 = vmatpush1.xpose.msra.mxu0 0.0
        %1003 = vmatprep.subr.mxu0 0.0
        %1004 = vmatpush1.xpose.msra.mxu0 0.0
        %1005 = vmatprep.subr.mxu0 0.0
        %1006 = vmatpush1.xpose.msra.mxu0 0.0
        %1007 = vmatprep.subr.mxu0 0.0
        %1008 = vmatpush1.xpose.msra.mxu0 0.0
        %1009 = vmatprep.subr.mxu0 0.0
        %1010 = vmatpush1.xpose.msra.mxu0 0.0
        %1011 = vmatprep.subr.mxu0 0.0
        %1012 = vmatpush1.xpose.msra.mxu0 0.0
        %1013 = vmatprep.subr.mxu0 0.0
        %1014 = vmatpush1.xpose.msra.mxu0 0.0
        %1015 = vmatprep.mubr.f32.mxu0 0.0
        %1016 = vmatmul.mubr.f32.gmra.mrb[0].mxu0 %v947
        %v1017 = vpop.f32.mrb[0].mxu0
        %v1018 = vadd.f32 0.0, %v1017
        %v1019 = vpop.f32.mrb[0].mxu0
        %1020 = vdwg.mxu0
        %v1021 = vsel %vm527, %v1018, -inf
        %1022 = vmax.xlane.f32.xlu0 %v1021
        %v1023 = vpop.xlane.xlu0 %1022
        %v1024 = vsub.f32 %v1018, %v1023
        %v1025 = vmul.f32 %v1024, 1.442695
        %v1026 = vpow.pop %v1025
        %v1027 = vsel %vm527, %v1026, 0.0
        %1028 = vadd.xlane.f32.xlu0 %v1027
        %v1029 = vpop.xlane.xlu0 %1028
        %1030 = vrot.lane.b32.xlu0 %v446, 80
        %v1031 = vpop.permute.xlu0 %1030
        %v1034 = vsel %vm527, %v1026, 0
        %1036 = vmatprep.subr.mxu0 0.0
        %1037 = vmatpush1.msra.mxu0 %v1031
        %1038 = vmatprep.subr.mxu0 0.0
        %1039 = vmatpush1.msra.mxu0 0.0
        %1040 = vmatprep.subr.mxu0 0.0
        %1041 = vmatpush1.msra.mxu0 0.0
        %1042 = vmatprep.subr.mxu0 0.0
        %1043 = vmatpush1.msra.mxu0 0.0
        %1044 = vmatprep.subr.mxu0 0.0
        %1045 = vmatpush1.msra.mxu0 0.0
        %1046 = vmatprep.subr.mxu0 0.0
        %1047 = vmatpush1.msra.mxu0 0.0
        %1048 = vmatprep.subr.mxu0 0.0
        %1049 = vmatpush1.msra.mxu0 0.0
        %1050 = vmatprep.subr.mxu0 0.0
        %1051 = vmatpush1.msra.mxu0 0.0
        %1052 = vmatprep.subr.mxu0 0.0
        %1053 = vmatpush1.msra.mxu0 0.0
        %1054 = vmatprep.subr.mxu0 0.0
        %1055 = vmatpush1.msra.mxu0 0.0
        %1056 = vmatprep.subr.mxu0 0.0
        %1057 = vmatpush1.msra.mxu0 0.0
        %1058 = vmatprep.subr.mxu0 0.0
        %1059 = vmatpush1.msra.mxu0 0.0
        %1060 = vmatprep.subr.mxu0 0.0
        %1061 = vmatpush1.msra.mxu0 0.0
        %1062 = vmatprep.subr.mxu0 0.0
        %1063 = vmatpush1.msra.mxu0 0.0
        %1064 = vmatprep.subr.mxu0 0.0
        %1065 = vmatpush1.msra.mxu0 0.0
        %1066 = vmatprep.subr.mxu0 0.0
        %1067 = vmatpush1.msra.mxu0 0.0
        %1068 = vmatprep.subr.mxu0 0.0
        %1069 = vmatpush1.msra.mxu0 0.0
        %1070 = vmatprep.subr.mxu0 0.0
        %1071 = vmatpush1.msra.mxu0 0.0
        %1072 = vmatprep.subr.mxu0 0.0
        %1073 = vmatpush1.msra.mxu0 0.0
        %1074 = vmatprep.subr.mxu0 0.0
        %1075 = vmatpush1.msra.mxu0 0.0
        %1076 = vmatprep.subr.mxu0 0.0
        %1077 = vmatpush1.msra.mxu0 0.0
        %1078 = vmatprep.subr.mxu0 0.0
        %1079 = vmatpush1.msra.mxu0 0.0
        %1080 = vmatprep.subr.mxu0 0.0
        %1081 = vmatpush1.msra.mxu0 0.0
        %1082 = vmatprep.subr.mxu0 0.0
        %1083 = vmatpush1.msra.mxu0 0.0
        %1084 = vmatprep.subr.mxu0 0.0
        %1085 = vmatpush1.msra.mxu0 0.0
        %1086 = vmatprep.subr.mxu0 0.0
        %1087 = vmatpush1.msra.mxu0 0.0
        %1088 = vmatprep.subr.mxu0 0.0
        %1089 = vmatpush1.msra.mxu0 0.0
        %1090 = vmatprep.subr.mxu0 0.0
        %1091 = vmatpush1.msra.mxu0 0.0
        %1092 = vmatprep.subr.mxu0 0.0
        %1093 = vmatpush1.msra.mxu0 0.0
        %1094 = vmatprep.subr.mxu0 0.0
        %1095 = vmatpush1.msra.mxu0 0.0
        %1096 = vmatprep.subr.mxu0 0.0
        %1097 = vmatpush1.msra.mxu0 0.0
        %1098 = vmatprep.subr.mxu0 0.0
        %1099 = vmatpush1.msra.mxu0 0.0
        %1100 = vmatprep.mubr.f32.mxu0 0.0
        %1101 = vmatmul.mubr.f32.gmra.mrb[0].mxu0 %v1034
        %v1102 = vpop.f32.mrb[0].mxu0
        %v1103 = vadd.f32 0.0, %v1102
        %v1104 = vpop.f32.mrb[0].mxu0
        %1105 = vdwg.mxu0
        %v1106 = vrcp.pop %v1029
        %v1107 = vmul.f32 %v1103, %v1106
        %1108 = vrot.lane.b32.xlu0 %v449, 64
        %v1109 = vpop.permute.xlu0 %1108
        %1110 = vrot.lane.b32.xlu0 %v377, 64
        %v1111 = vpop.permute.xlu0 %1110
        %v1112 = vsel %vm450, %v1109, 0
        %v1114 = vsel %vm450, %v1111, 0
        %1116 = vmatprep.subr.mxu0 0.0
        %1117 = vmatpush1.xpose.msra.mxu0 %v1114
        %1118 = vmatprep.subr.mxu0 0.0
        %1119 = vmatpush1.xpose.msra.mxu0 0.0
        %1120 = vmatprep.subr.mxu0 0.0
        %1121 = vmatpush1.xpose.msra.mxu0 0.0
        %1122 = vmatprep.subr.mxu0 0.0
        %1123 = vmatpush1.xpose.msra.mxu0 0.0
        %1124 = vmatprep.subr.mxu0 0.0
        %1125 = vmatpush1.xpose.msra.mxu0 0.0
        %1126 = vmatprep.subr.mxu0 0.0
        %1127 = vmatpush1.xpose.msra.mxu0 0.0
        %1128 = vmatprep.subr.mxu0 0.0
        %1129 = vmatpush1.xpose.msra.mxu0 0.0
        %1130 = vmatprep.subr.mxu0 0.0
        %1131 = vmatpush1.xpose.msra.mxu0 0.0
        %1132 = vmatprep.subr.mxu0 0.0
        %1133 = vmatpush1.xpose.msra.mxu0 0.0
        %1134 = vmatprep.subr.mxu0 0.0
        %1135 = vmatpush1.xpose.msra.mxu0 0.0
        %1136 = vmatprep.subr.mxu0 0.0
        %1137 = vmatpush1.xpose.msra.mxu0 0.0
        %1138 = vmatprep.subr.mxu0 0.0
        %1139 = vmatpush1.xpose.msra.mxu0 0.0
        %1140 = vmatprep.subr.mxu0 0.0
        %1141 = vmatpush1.xpose.msra.mxu0 0.0
        %1142 = vmatprep.subr.mxu0 0.0
        %1143 = vmatpush1.xpose.msra.mxu0 0.0
        %1144 = vmatprep.subr.mxu0 0.0
        %1145 = vmatpush1.xpose.msra.mxu0 0.0
        %1146 = vmatprep.subr.mxu0 0.0
        %1147 = vmatpush1.xpose.msra.mxu0 0.0
        %1148 = vmatprep.subr.mxu0 0.0
        %1149 = vmatpush1.xpose.msra.mxu0 0.0
        %1150 = vmatprep.subr.mxu0 0.0
        %1151 = vmatpush1.xpose.msra.mxu0 0.0
        %1152 = vmatprep.subr.mxu0 0.0
        %1153 = vmatpush1.xpose.msra.mxu0 0.0
        %1154 = vmatprep.subr.mxu0 0.0
        %1155 = vmatpush1.xpose.msra.mxu0 0.0
        %1156 = vmatprep.subr.mxu0 0.0
        %1157 = vmatpush1.xpose.msra.mxu0 0.0
        %1158 = vmatprep.subr.mxu0 0.0
        %1159 = vmatpush1.xpose.msra.mxu0 0.0
        %1160 = vmatprep.subr.mxu0 0.0
        %1161 = vmatpush1.xpose.msra.mxu0 0.0
        %1162 = vmatprep.subr.mxu0 0.0
        %1163 = vmatpush1.xpose.msra.mxu0 0.0
        %1164 = vmatprep.subr.mxu0 0.0
        %1165 = vmatpush1.xpose.msra.mxu0 0.0
        %1166 = vmatprep.subr.mxu0 0.0
        %1167 = vmatpush1.xpose.msra.mxu0 0.0
        %1168 = vmatprep.subr.mxu0 0.0
        %1169 = vmatpush1.xpose.msra.mxu0 0.0
        %1170 = vmatprep.subr.mxu0 0.0
        %1171 = vmatpush1.xpose.msra.mxu0 0.0
        %1172 = vmatprep.subr.mxu0 0.0
        %1173 = vmatpush1.xpose.msra.mxu0 0.0
        %1174 = vmatprep.subr.mxu0 0.0
        %1175 = vmatpush1.xpose.msra.mxu0 0.0
        %1176 = vmatprep.subr.mxu0 0.0
        %1177 = vmatpush1.xpose.msra.mxu0 0.0
        %1178 = vmatprep.subr.mxu0 0.0
        %1179 = vmatpush1.xpose.msra.mxu0 0.0
        %1180 = vmatprep.mubr.f32.mxu0 0.0
        %1181 = vmatmul.mubr.f32.gmra.mrb[0].mxu0 %v1112
        %v1182 = vpop.f32.mrb[0].mxu0
        %v1183 = vadd.f32 0.0, %v1182
        %v1184 = vpop.f32.mrb[0].mxu0
        %1185 = vdwg.mxu0
        %v1186 = vsel %vm527, %v1183, -inf
        %1187 = vmax.xlane.f32.xlu0 %v1186
        %v1188 = vpop.xlane.xlu0 %1187
        %v1189 = vsub.f32 %v1183, %v1188
        %v1190 = vmul.f32 %v1189, 1.442695
        %v1191 = vpow.pop %v1190
        %v1192 = vsel %vm527, %v1191, 0.0
        %1193 = vadd.xlane.f32.xlu0 %v1192
        %v1194 = vpop.xlane.xlu0 %1193
        %1195 = vrot.lane.b32.xlu0 %v446, 64
        %v1196 = vpop.permute.xlu0 %1195
        %v1199 = vsel %vm527, %v1191, 0
        %1201 = vmatprep.subr.mxu0 0.0
        %1202 = vmatpush1.msra.mxu0 %v1196
        %1203 = vmatprep.subr.mxu0 0.0
        %1204 = vmatpush1.msra.mxu0 0.0
        %1205 = vmatprep.subr.mxu0 0.0
        %1206 = vmatpush1.msra.mxu0 0.0
        %1207 = vmatprep.subr.mxu0 0.0
        %1208 = vmatpush1.msra.mxu0 0.0
        %1209 = vmatprep.subr.mxu0 0.0
        %1210 = vmatpush1.msra.mxu0 0.0
        %1211 = vmatprep.subr.mxu0 0.0
        %1212 = vmatpush1.msra.mxu0 0.0
        %1213 = vmatprep.subr.mxu0 0.0
        %1214 = vmatpush1.msra.mxu0 0.0
        %1215 = vmatprep.subr.mxu0 0.0
        %1216 = vmatpush1.msra.mxu0 0.0
        %1217 = vmatprep.subr.mxu0 0.0
        %1218 = vmatpush1.msra.mxu0 0.0
        %1219 = vmatprep.subr.mxu0 0.0
        %1220 = vmatpush1.msra.mxu0 0.0
        %1221 = vmatprep.subr.mxu0 0.0
        %1222 = vmatpush1.msra.mxu0 0.0
        %1223 = vmatprep.subr.mxu0 0.0
        %1224 = vmatpush1.msra.mxu0 0.0
        %1225 = vmatprep.subr.mxu0 0.0
        %1226 = vmatpush1.msra.mxu0 0.0
        %1227 = vmatprep.subr.mxu0 0.0
        %1228 = vmatpush1.msra.mxu0 0.0
        %1229 = vmatprep.subr.mxu0 0.0
        %1230 = vmatpush1.msra.mxu0 0.0
        %1231 = vmatprep.subr.mxu0 0.0
        %1232 = vmatpush1.msra.mxu0 0.0
        %1233 = vmatprep.subr.mxu0 0.0
        %1234 = vmatpush1.msra.mxu0 0.0
        %1235 = vmatprep.subr.mxu0 0.0
        %1236 = vmatpush1.msra.mxu0 0.0
        %1237 = vmatprep.subr.mxu0 0.0
        %1238 = vmatpush1.msra.mxu0 0.0
        %1239 = vmatprep.subr.mxu0 0.0
        %1240 = vmatpush1.msra.mxu0 0.0
        %1241 = vmatprep.subr.mxu0 0.0
        %1242 = vmatpush1.msra.mxu0 0.0
        %1243 = vmatprep.subr.mxu0 0.0
        %1244 = vmatpush1.msra.mxu0 0.0
        %1245 = vmatprep.subr.mxu0 0.0
        %1246 = vmatpush1.msra.mxu0 0.0
        %1247 = vmatprep.subr.mxu0 0.0
        %1248 = vmatpush1.msra.mxu0 0.0
        %1249 = vmatprep.subr.mxu0 0.0
        %1250 = vmatpush1.msra.mxu0 0.0
        %1251 = vmatprep.subr.mxu0 0.0
        %1252 = vmatpush1.msra.mxu0 0.0
        %1253 = vmatprep.subr.mxu0 0.0
        %1254 = vmatpush1.msra.mxu0 0.0
        %1255 = vmatprep.subr.mxu0 0.0
        %1256 = vmatpush1.msra.mxu0 0.0
        %1257 = vmatprep.subr.mxu0 0.0
        %1258 = vmatpush1.msra.mxu0 0.0
        %1259 = vmatprep.subr.mxu0 0.0
        %1260 = vmatpush1.msra.mxu0 0.0
        %1261 = vmatprep.subr.mxu0 0.0
        %1262 = vmatpush1.msra.mxu0 0.0
        %1263 = vmatprep.subr.mxu0 0.0
        %1264 = vmatpush1.msra.mxu0 0.0
        %1265 = vmatprep.mubr.f32.mxu0 0.0
        %1266 = vmatmul.mubr.f32.gmra.mrb[0].mxu0 %v1199
        %v1267 = vpop.f32.mrb[0].mxu0
        %v1268 = vadd.f32 0.0, %v1267
        %v1269 = vpop.f32.mrb[0].mxu0
        %1270 = vdwg.mxu0
        %v1271 = vrcp.pop %v1194
        %v1272 = vmul.f32 %v1268, %v1271
        %1273 = vrot.lane.b32.xlu0 %v449, 48
        %v1274 = vpop.permute.xlu0 %1273
        %1275 = vrot.lane.b32.xlu0 %v377, 48
        %v1276 = vpop.permute.xlu0 %1275
        %v1277 = vsel %vm450, %v1274, 0
        %v1279 = vsel %vm450, %v1276, 0
        %1281 = vmatprep.subr.mxu0 0.0
        %1282 = vmatpush1.xpose.msra.mxu0 %v1279
        %1283 = vmatprep.subr.mxu0 0.0
        %1284 = vmatpush1.xpose.msra.mxu0 0.0
        %1285 = vmatprep.subr.mxu0 0.0
        %1286 = vmatpush1.xpose.msra.mxu0 0.0
        %1287 = vmatprep.subr.mxu0 0.0
        %1288 = vmatpush1.xpose.msra.mxu0 0.0
        %1289 = vmatprep.subr.mxu0 0.0
        %1290 = vmatpush1.xpose.msra.mxu0 0.0
        %1291 = vmatprep.subr.mxu0 0.0
        %1292 = vmatpush1.xpose.msra.mxu0 0.0
        %1293 = vmatprep.subr.mxu0 0.0
        %1294 = vmatpush1.xpose.msra.mxu0 0.0
        %1295 = vmatprep.subr.mxu0 0.0
        %1296 = vmatpush1.xpose.msra.mxu0 0.0
        %1297 = vmatprep.subr.mxu0 0.0
        %1298 = vmatpush1.xpose.msra.mxu0 0.0
        %1299 = vmatprep.subr.mxu0 0.0
        %1300 = vmatpush1.xpose.msra.mxu0 0.0
        %1301 = vmatprep.subr.mxu0 0.0
        %1302 = vmatpush1.xpose.msra.mxu0 0.0
        %1303 = vmatprep.subr.mxu0 0.0
        %1304 = vmatpush1.xpose.msra.mxu0 0.0
        %1305 = vmatprep.subr.mxu0 0.0
        %1306 = vmatpush1.xpose.msra.mxu0 0.0
        %1307 = vmatprep.subr.mxu0 0.0
        %1308 = vmatpush1.xpose.msra.mxu0 0.0
        %1309 = vmatprep.subr.mxu0 0.0
        %1310 = vmatpush1.xpose.msra.mxu0 0.0
        %1311 = vmatprep.subr.mxu0 0.0
        %1312 = vmatpush1.xpose.msra.mxu0 0.0
        %1313 = vmatprep.subr.mxu0 0.0
        %1314 = vmatpush1.xpose.msra.mxu0 0.0
        %1315 = vmatprep.subr.mxu0 0.0
        %1316 = vmatpush1.xpose.msra.mxu0 0.0
        %1317 = vmatprep.subr.mxu0 0.0
        %1318 = vmatpush1.xpose.msra.mxu0 0.0
        %1319 = vmatprep.subr.mxu0 0.0
        %1320 = vmatpush1.xpose.msra.mxu0 0.0
        %1321 = vmatprep.subr.mxu0 0.0
        %1322 = vmatpush1.xpose.msra.mxu0 0.0
        %1323 = vmatprep.subr.mxu0 0.0
        %1324 = vmatpush1.xpose.msra.mxu0 0.0
        %1325 = vmatprep.subr.mxu0 0.0
        %1326 = vmatpush1.xpose.msra.mxu0 0.0
        %1327 = vmatprep.subr.mxu0 0.0
        %1328 = vmatpush1.xpose.msra.mxu0 0.0
        %1329 = vmatprep.subr.mxu0 0.0
        %1330 = vmatpush1.xpose.msra.mxu0 0.0
        %1331 = vmatprep.subr.mxu0 0.0
        %1332 = vmatpush1.xpose.msra.mxu0 0.0
        %1333 = vmatprep.subr.mxu0 0.0
        %1334 = vmatpush1.xpose.msra.mxu0 0.0
        %1335 = vmatprep.subr.mxu0 0.0
        %1336 = vmatpush1.xpose.msra.mxu0 0.0
        %1337 = vmatprep.subr.mxu0 0.0
        %1338 = vmatpush1.xpose.msra.mxu0 0.0
        %1339 = vmatprep.subr.mxu0 0.0
        %1340 = vmatpush1.xpose.msra.mxu0 0.0
        %1341 = vmatprep.subr.mxu0 0.0
        %1342 = vmatpush1.xpose.msra.mxu0 0.0
        %1343 = vmatprep.subr.mxu0 0.0
        %1344 = vmatpush1.xpose.msra.mxu0 0.0
        %1345 = vmatprep.mubr.f32.mxu0 0.0
        %1346 = vmatmul.mubr.f32.gmra.mrb[0].mxu0 %v1277
        %v1347 = vpop.f32.mrb[0].mxu0
        %v1348 = vadd.f32 0.0, %v1347
        %v1349 = vpop.f32.mrb[0].mxu0
        %1350 = vdwg.mxu0
        %v1351 = vsel %vm527, %v1348, -inf
        %1352 = vmax.xlane.f32.xlu0 %v1351
        %v1353 = vpop.xlane.xlu0 %1352
        %v1354 = vsub.f32 %v1348, %v1353
        %v1355 = vmul.f32 %v1354, 1.442695
        %v1356 = vpow.pop %v1355
        %v1357 = vsel %vm527, %v1356, 0.0
        %1358 = vadd.xlane.f32.xlu0 %v1357
        %v1359 = vpop.xlane.xlu0 %1358
        %1360 = vrot.lane.b32.xlu0 %v446, 48
        %v1361 = vpop.permute.xlu0 %1360
        %v1364 = vsel %vm527, %v1356, 0
        %1366 = vmatprep.subr.mxu0 0.0
        %1367 = vmatpush1.msra.mxu0 %v1361
        %1368 = vmatprep.subr.mxu0 0.0
        %1369 = vmatpush1.msra.mxu0 0.0
        %1370 = vmatprep.subr.mxu0 0.0
        %1371 = vmatpush1.msra.mxu0 0.0
        %1372 = vmatprep.subr.mxu0 0.0
        %1373 = vmatpush1.msra.mxu0 0.0
        %1374 = vmatprep.subr.mxu0 0.0
        %1375 = vmatpush1.msra.mxu0 0.0
        %1376 = vmatprep.subr.mxu0 0.0
        %1377 = vmatpush1.msra.mxu0 0.0
        %1378 = vmatprep.subr.mxu0 0.0
        %1379 = vmatpush1.msra.mxu0 0.0
        %1380 = vmatprep.subr.mxu0 0.0
        %1381 = vmatpush1.msra.mxu0 0.0
        %1382 = vmatprep.subr.mxu0 0.0
        %1383 = vmatpush1.msra.mxu0 0.0
        %1384 = vmatprep.subr.mxu0 0.0
        %1385 = vmatpush1.msra.mxu0 0.0
        %1386 = vmatprep.subr.mxu0 0.0
        %1387 = vmatpush1.msra.mxu0 0.0
        %1388 = vmatprep.subr.mxu0 0.0
        %1389 = vmatpush1.msra.mxu0 0.0
        %1390 = vmatprep.subr.mxu0 0.0
        %1391 = vmatpush1.msra.mxu0 0.0
        %1392 = vmatprep.subr.mxu0 0.0
        %1393 = vmatpush1.msra.mxu0 0.0
        %1394 = vmatprep.subr.mxu0 0.0
        %1395 = vmatpush1.msra.mxu0 0.0
        %1396 = vmatprep.subr.mxu0 0.0
        %1397 = vmatpush1.msra.mxu0 0.0
        %1398 = vmatprep.subr.mxu0 0.0
        %1399 = vmatpush1.msra.mxu0 0.0
        %1400 = vmatprep.subr.mxu0 0.0
        %1401 = vmatpush1.msra.mxu0 0.0
        %1402 = vmatprep.subr.mxu0 0.0
        %1403 = vmatpush1.msra.mxu0 0.0
        %1404 = vmatprep.subr.mxu0 0.0
        %1405 = vmatpush1.msra.mxu0 0.0
        %1406 = vmatprep.subr.mxu0 0.0
        %1407 = vmatpush1.msra.mxu0 0.0
        %1408 = vmatprep.subr.mxu0 0.0
        %1409 = vmatpush1.msra.mxu0 0.0
        %1410 = vmatprep.subr.mxu0 0.0
        %1411 = vmatpush1.msra.mxu0 0.0
        %1412 = vmatprep.subr.mxu0 0.0
        %1413 = vmatpush1.msra.mxu0 0.0
        %1414 = vmatprep.subr.mxu0 0.0
        %1415 = vmatpush1.msra.mxu0 0.0
        %1416 = vmatprep.subr.mxu0 0.0
        %1417 = vmatpush1.msra.mxu0 0.0
        %1418 = vmatprep.subr.mxu0 0.0
        %1419 = vmatpush1.msra.mxu0 0.0
        %1420 = vmatprep.subr.mxu0 0.0
        %1421 = vmatpush1.msra.mxu0 0.0
        %1422 = vmatprep.subr.mxu0 0.0
        %1423 = vmatpush1.msra.mxu0 0.0
        %1424 = vmatprep.subr.mxu0 0.0
        %1425 = vmatpush1.msra.mxu0 0.0
        %1426 = vmatprep.subr.mxu0 0.0
        %1427 = vmatpush1.msra.mxu0 0.0
        %1428 = vmatprep.subr.mxu0 0.0
        %1429 = vmatpush1.msra.mxu0 0.0
        %1430 = vmatprep.mubr.f32.mxu0 0.0
        %1431 = vmatmul.mubr.f32.gmra.mrb[0].mxu0 %v1364
        %v1432 = vpop.f32.mrb[0].mxu0
        %v1433 = vadd.f32 0.0, %v1432
        %v1434 = vpop.f32.mrb[0].mxu0
        %1435 = vdwg.mxu0
        %v1436 = vrcp.pop %v1359
        %v1437 = vmul.f32 %v1433, %v1436
        %1438 = vrot.lane.b32.xlu0 %v449, 32
        %v1439 = vpop.permute.xlu0 %1438
        %1440 = vrot.lane.b32.xlu0 %v377, 32
        %v1441 = vpop.permute.xlu0 %1440
        %v1442 = vsel %vm450, %v1439, 0
        %v1444 = vsel %vm450, %v1441, 0
        %1446 = vmatprep.subr.mxu0 0.0
        %1447 = vmatpush1.xpose.msra.mxu0 %v1444
        %1448 = vmatprep.subr.mxu0 0.0
        %1449 = vmatpush1.xpose.msra.mxu0 0.0
        %1450 = vmatprep.subr.mxu0 0.0
        %1451 = vmatpush1.xpose.msra.mxu0 0.0
        %1452 = vmatprep.subr.mxu0 0.0
        %1453 = vmatpush1.xpose.msra.mxu0 0.0
        %1454 = vmatprep.subr.mxu0 0.0
        %1455 = vmatpush1.xpose.msra.mxu0 0.0
        %1456 = vmatprep.subr.mxu0 0.0
        %1457 = vmatpush1.xpose.msra.mxu0 0.0
        %1458 = vmatprep.subr.mxu0 0.0
        %1459 = vmatpush1.xpose.msra.mxu0 0.0
        %1460 = vmatprep.subr.mxu0 0.0
        %1461 = vmatpush1.xpose.msra.mxu0 0.0
        %1462 = vmatprep.subr.mxu0 0.0
        %1463 = vmatpush1.xpose.msra.mxu0 0.0
        %1464 = vmatprep.subr.mxu0 0.0
        %1465 = vmatpush1.xpose.msra.mxu0 0.0
        %1466 = vmatprep.subr.mxu0 0.0
        %1467 = vmatpush1.xpose.msra.mxu0 0.0
        %1468 = vmatprep.subr.mxu0 0.0
        %1469 = vmatpush1.xpose.msra.mxu0 0.0
        %1470 = vmatprep.subr.mxu0 0.0
        %1471 = vmatpush1.xpose.msra.mxu0 0.0
        %1472 = vmatprep.subr.mxu0 0.0
        %1473 = vmatpush1.xpose.msra.mxu0 0.0
        %1474 = vmatprep.subr.mxu0 0.0
        %1475 = vmatpush1.xpose.msra.mxu0 0.0
        %1476 = vmatprep.subr.mxu0 0.0
        %1477 = vmatpush1.xpose.msra.mxu0 0.0
        %1478 = vmatprep.subr.mxu0 0.0
        %1479 = vmatpush1.xpose.msra.mxu0 0.0
        %1480 = vmatprep.subr.mxu0 0.0
        %1481 = vmatpush1.xpose.msra.mxu0 0.0
        %1482 = vmatprep.subr.mxu0 0.0
        %1483 = vmatpush1.xpose.msra.mxu0 0.0
        %1484 = vmatprep.subr.mxu0 0.0
        %1485 = vmatpush1.xpose.msra.mxu0 0.0
        %1486 = vmatprep.subr.mxu0 0.0
        %1487 = vmatpush1.xpose.msra.mxu0 0.0
        %1488 = vmatprep.subr.mxu0 0.0
        %1489 = vmatpush1.xpose.msra.mxu0 0.0
        %1490 = vmatprep.subr.mxu0 0.0
        %1491 = vmatpush1.xpose.msra.mxu0 0.0
        %1492 = vmatprep.subr.mxu0 0.0
        %1493 = vmatpush1.xpose.msra.mxu0 0.0
        %1494 = vmatprep.subr.mxu0 0.0
        %1495 = vmatpush1.xpose.msra.mxu0 0.0
        %1496 = vmatprep.subr.mxu0 0.0
        %1497 = vmatpush1.xpose.msra.mxu0 0.0
        %1498 = vmatprep.subr.mxu0 0.0
        %1499 = vmatpush1.xpose.msra.mxu0 0.0
        %1500 = vmatprep.subr.mxu0 0.0
        %1501 = vmatpush1.xpose.msra.mxu0 0.0
        %1502 = vmatprep.subr.mxu0 0.0
        %1503 = vmatpush1.xpose.msra.mxu0 0.0
        %1504 = vmatprep.subr.mxu0 0.0
        %1505 = vmatpush1.xpose.msra.mxu0 0.0
        %1506 = vmatprep.subr.mxu0 0.0
        %1507 = vmatpush1.xpose.msra.mxu0 0.0
        %1508 = vmatprep.subr.mxu0 0.0
        %1509 = vmatpush1.xpose.msra.mxu0 0.0
        %1510 = vmatprep.mubr.f32.mxu0 0.0
        %1511 = vmatmul.mubr.f32.gmra.mrb[0].mxu0 %v1442
        %v1512 = vpop.f32.mrb[0].mxu0
        %v1513 = vadd.f32 0.0, %v1512
        %v1514 = vpop.f32.mrb[0].mxu0
        %1515 = vdwg.mxu0
        %v1516 = vsel %vm527, %v1513, -inf
        %1517 = vmax.xlane.f32.xlu0 %v1516
        %v1518 = vpop.xlane.xlu0 %1517
        %v1519 = vsub.f32 %v1513, %v1518
        %v1520 = vmul.f32 %v1519, 1.442695
        %v1521 = vpow.pop %v1520
        %v1522 = vsel %vm527, %v1521, 0.0
        %1523 = vadd.xlane.f32.xlu0 %v1522
        %v1524 = vpop.xlane.xlu0 %1523
        %1525 = vrot.lane.b32.xlu0 %v446, 32
        %v1526 = vpop.permute.xlu0 %1525
        %v1529 = vsel %vm527, %v1521, 0
        %1531 = vmatprep.subr.mxu0 0.0
        %1532 = vmatpush1.msra.mxu0 %v1526
        %1533 = vmatprep.subr.mxu0 0.0
        %1534 = vmatpush1.msra.mxu0 0.0
        %1535 = vmatprep.subr.mxu0 0.0
        %1536 = vmatpush1.msra.mxu0 0.0
        %1537 = vmatprep.subr.mxu0 0.0
        %1538 = vmatpush1.msra.mxu0 0.0
        %1539 = vmatprep.subr.mxu0 0.0
        %1540 = vmatpush1.msra.mxu0 0.0
        %1541 = vmatprep.subr.mxu0 0.0
        %1542 = vmatpush1.msra.mxu0 0.0
        %1543 = vmatprep.subr.mxu0 0.0
        %1544 = vmatpush1.msra.mxu0 0.0
        %1545 = vmatprep.subr.mxu0 0.0
        %1546 = vmatpush1.msra.mxu0 0.0
        %1547 = vmatprep.subr.mxu0 0.0
        %1548 = vmatpush1.msra.mxu0 0.0
        %1549 = vmatprep.subr.mxu0 0.0
        %1550 = vmatpush1.msra.mxu0 0.0
        %1551 = vmatprep.subr.mxu0 0.0
        %1552 = vmatpush1.msra.mxu0 0.0
        %1553 = vmatprep.subr.mxu0 0.0
        %1554 = vmatpush1.msra.mxu0 0.0
        %1555 = vmatprep.subr.mxu0 0.0
        %1556 = vmatpush1.msra.mxu0 0.0
        %1557 = vmatprep.subr.mxu0 0.0
        %1558 = vmatpush1.msra.mxu0 0.0
        %1559 = vmatprep.subr.mxu0 0.0
        %1560 = vmatpush1.msra.mxu0 0.0
        %1561 = vmatprep.subr.mxu0 0.0
        %1562 = vmatpush1.msra.mxu0 0.0
        %1563 = vmatprep.subr.mxu0 0.0
        %1564 = vmatpush1.msra.mxu0 0.0
        %1565 = vmatprep.subr.mxu0 0.0
        %1566 = vmatpush1.msra.mxu0 0.0
        %1567 = vmatprep.subr.mxu0 0.0
        %1568 = vmatpush1.msra.mxu0 0.0
        %1569 = vmatprep.subr.mxu0 0.0
        %1570 = vmatpush1.msra.mxu0 0.0
        %1571 = vmatprep.subr.mxu0 0.0
        %1572 = vmatpush1.msra.mxu0 0.0
        %1573 = vmatprep.subr.mxu0 0.0
        %1574 = vmatpush1.msra.mxu0 0.0
        %1575 = vmatprep.subr.mxu0 0.0
        %1576 = vmatpush1.msra.mxu0 0.0
        %1577 = vmatprep.subr.mxu0 0.0
        %1578 = vmatpush1.msra.mxu0 0.0
        %1579 = vmatprep.subr.mxu0 0.0
        %1580 = vmatpush1.msra.mxu0 0.0
        %1581 = vmatprep.subr.mxu0 0.0
        %1582 = vmatpush1.msra.mxu0 0.0
        %1583 = vmatprep.subr.mxu0 0.0
        %1584 = vmatpush1.msra.mxu0 0.0
        %1585 = vmatprep.subr.mxu0 0.0
        %1586 = vmatpush1.msra.mxu0 0.0
        %1587 = vmatprep.subr.mxu0 0.0
        %1588 = vmatpush1.msra.mxu0 0.0
        %1589 = vmatprep.subr.mxu0 0.0
        %1590 = vmatpush1.msra.mxu0 0.0
        %1591 = vmatprep.subr.mxu0 0.0
        %1592 = vmatpush1.msra.mxu0 0.0
        %1593 = vmatprep.subr.mxu0 0.0
        %1594 = vmatpush1.msra.mxu0 0.0
        %1595 = vmatprep.mubr.f32.mxu0 0.0
        %1596 = vmatmul.mubr.f32.gmra.mrb[0].mxu0 %v1529
        %v1597 = vpop.f32.mrb[0].mxu0
        %v1598 = vadd.f32 0.0, %v1597
        %v1599 = vpop.f32.mrb[0].mxu0
        %1600 = vdwg.mxu0
        %v1601 = vrcp.pop %v1524
        %v1602 = vmul.f32 %v1598, %v1601
        %1603 = vrot.lane.b32.xlu0 %v449, 16
        %v1604 = vpop.permute.xlu0 %1603
        %1605 = vrot.lane.b32.xlu0 %v377, 16
        %v1606 = vpop.permute.xlu0 %1605
        %v1607 = vsel %vm450, %v1604, 0
        %v1609 = vsel %vm450, %v1606, 0
        %1611 = vmatprep.subr.mxu0 0.0
        %1612 = vmatpush1.xpose.msra.mxu0 %v1609
        %1613 = vmatprep.subr.mxu0 0.0
        %1614 = vmatpush1.xpose.msra.mxu0 0.0
        %1615 = vmatprep.subr.mxu0 0.0
        %1616 = vmatpush1.xpose.msra.mxu0 0.0
        %1617 = vmatprep.subr.mxu0 0.0
        %1618 = vmatpush1.xpose.msra.mxu0 0.0
        %1619 = vmatprep.subr.mxu0 0.0
        %1620 = vmatpush1.xpose.msra.mxu0 0.0
        %1621 = vmatprep.subr.mxu0 0.0
        %1622 = vmatpush1.xpose.msra.mxu0 0.0
        %1623 = vmatprep.subr.mxu0 0.0
        %1624 = vmatpush1.xpose.msra.mxu0 0.0
        %1625 = vmatprep.subr.mxu0 0.0
        %1626 = vmatpush1.xpose.msra.mxu0 0.0
        %1627 = vmatprep.subr.mxu0 0.0
        %1628 = vmatpush1.xpose.msra.mxu0 0.0
        %1629 = vmatprep.subr.mxu0 0.0
        %1630 = vmatpush1.xpose.msra.mxu0 0.0
        %1631 = vmatprep.subr.mxu0 0.0
        %1632 = vmatpush1.xpose.msra.mxu0 0.0
        %1633 = vmatprep.subr.mxu0 0.0
        %1634 = vmatpush1.xpose.msra.mxu0 0.0
        %1635 = vmatprep.subr.mxu0 0.0
        %1636 = vmatpush1.xpose.msra.mxu0 0.0
        %1637 = vmatprep.subr.mxu0 0.0
        %1638 = vmatpush1.xpose.msra.mxu0 0.0
        %1639 = vmatprep.subr.mxu0 0.0
        %1640 = vmatpush1.xpose.msra.mxu0 0.0
        %1641 = vmatprep.subr.mxu0 0.0
        %1642 = vmatpush1.xpose.msra.mxu0 0.0
        %1643 = vmatprep.subr.mxu0 0.0
        %1644 = vmatpush1.xpose.msra.mxu0 0.0
        %1645 = vmatprep.subr.mxu0 0.0
        %1646 = vmatpush1.xpose.msra.mxu0 0.0
        %1647 = vmatprep.subr.mxu0 0.0
        %1648 = vmatpush1.xpose.msra.mxu0 0.0
        %1649 = vmatprep.subr.mxu0 0.0
        %1650 = vmatpush1.xpose.msra.mxu0 0.0
        %1651 = vmatprep.subr.mxu0 0.0
        %1652 = vmatpush1.xpose.msra.mxu0 0.0
        %1653 = vmatprep.subr.mxu0 0.0
        %1654 = vmatpush1.xpose.msra.mxu0 0.0
        %1655 = vmatprep.subr.mxu0 0.0
        %1656 = vmatpush1.xpose.msra.mxu0 0.0
        %1657 = vmatprep.subr.mxu0 0.0
        %1658 = vmatpush1.xpose.msra.mxu0 0.0
        %1659 = vmatprep.subr.mxu0 0.0
        %1660 = vmatpush1.xpose.msra.mxu0 0.0
        %1661 = vmatprep.subr.mxu0 0.0
        %1662 = vmatpush1.xpose.msra.mxu0 0.0
        %1663 = vmatprep.subr.mxu0 0.0
        %1664 = vmatpush1.xpose.msra.mxu0 0.0
        %1665 = vmatprep.subr.mxu0 0.0
        %1666 = vmatpush1.xpose.msra.mxu0 0.0
        %1667 = vmatprep.subr.mxu0 0.0
        %1668 = vmatpush1.xpose.msra.mxu0 0.0
        %1669 = vmatprep.subr.mxu0 0.0
        %1670 = vmatpush1.xpose.msra.mxu0 0.0
        %1671 = vmatprep.subr.mxu0 0.0
        %1672 = vmatpush1.xpose.msra.mxu0 0.0
        %1673 = vmatprep.subr.mxu0 0.0
        %1674 = vmatpush1.xpose.msra.mxu0 0.0
        %1675 = vmatprep.mubr.f32.mxu0 0.0
        %1676 = vmatmul.mubr.f32.gmra.mrb[0].mxu0 %v1607
        %v1677 = vpop.f32.mrb[0].mxu0
        %v1678 = vadd.f32 0.0, %v1677
        %v1679 = vpop.f32.mrb[0].mxu0
        %1680 = vdwg.mxu0
        %v1681 = vsel %vm527, %v1678, -inf
        %1682 = vmax.xlane.f32.xlu0 %v1681
        %v1683 = vpop.xlane.xlu0 %1682
        %v1684 = vsub.f32 %v1678, %v1683
        %v1685 = vmul.f32 %v1684, 1.442695
        %v1686 = vpow.pop %v1685
        %v1687 = vsel %vm527, %v1686, 0.0
        %1688 = vadd.xlane.f32.xlu0 %v1687
        %v1689 = vpop.xlane.xlu0 %1688
        %1690 = vrot.lane.b32.xlu0 %v446, 16
        %v1691 = vpop.permute.xlu0 %1690
        %v1694 = vsel %vm527, %v1686, 0
        %1696 = vmatprep.subr.mxu0 0.0
        %1697 = vmatpush1.msra.mxu0 %v1691
        %1698 = vmatprep.subr.mxu0 0.0
        %1699 = vmatpush1.msra.mxu0 0.0
        %1700 = vmatprep.subr.mxu0 0.0
        %1701 = vmatpush1.msra.mxu0 0.0
        %1702 = vmatprep.subr.mxu0 0.0
        %1703 = vmatpush1.msra.mxu0 0.0
        %1704 = vmatprep.subr.mxu0 0.0
        %1705 = vmatpush1.msra.mxu0 0.0
        %1706 = vmatprep.subr.mxu0 0.0
        %1707 = vmatpush1.msra.mxu0 0.0
        %1708 = vmatprep.subr.mxu0 0.0
        %1709 = vmatpush1.msra.mxu0 0.0
        %1710 = vmatprep.subr.mxu0 0.0
        %1711 = vmatpush1.msra.mxu0 0.0
        %1712 = vmatprep.subr.mxu0 0.0
        %1713 = vmatpush1.msra.mxu0 0.0
        %1714 = vmatprep.subr.mxu0 0.0
        %1715 = vmatpush1.msra.mxu0 0.0
        %1716 = vmatprep.subr.mxu0 0.0
        %1717 = vmatpush1.msra.mxu0 0.0
        %1718 = vmatprep.subr.mxu0 0.0
        %1719 = vmatpush1.msra.mxu0 0.0
        %1720 = vmatprep.subr.mxu0 0.0
        %1721 = vmatpush1.msra.mxu0 0.0
        %1722 = vmatprep.subr.mxu0 0.0
        %1723 = vmatpush1.msra.mxu0 0.0
        %1724 = vmatprep.subr.mxu0 0.0
        %1725 = vmatpush1.msra.mxu0 0.0
        %1726 = vmatprep.subr.mxu0 0.0
        %1727 = vmatpush1.msra.mxu0 0.0
        %1728 = vmatprep.subr.mxu0 0.0
        %1729 = vmatpush1.msra.mxu0 0.0
        %1730 = vmatprep.subr.mxu0 0.0
        %1731 = vmatpush1.msra.mxu0 0.0
        %1732 = vmatprep.subr.mxu0 0.0
        %1733 = vmatpush1.msra.mxu0 0.0
        %1734 = vmatprep.subr.mxu0 0.0
        %1735 = vmatpush1.msra.mxu0 0.0
        %1736 = vmatprep.subr.mxu0 0.0
        %1737 = vmatpush1.msra.mxu0 0.0
        %1738 = vmatprep.subr.mxu0 0.0
        %1739 = vmatpush1.msra.mxu0 0.0
        %1740 = vmatprep.subr.mxu0 0.0
        %1741 = vmatpush1.msra.mxu0 0.0
        %1742 = vmatprep.subr.mxu0 0.0
        %1743 = vmatpush1.msra.mxu0 0.0
        %1744 = vmatprep.subr.mxu0 0.0
        %1745 = vmatpush1.msra.mxu0 0.0
        %1746 = vmatprep.subr.mxu0 0.0
        %1747 = vmatpush1.msra.mxu0 0.0
        %1748 = vmatprep.subr.mxu0 0.0
        %1749 = vmatpush1.msra.mxu0 0.0
        %1750 = vmatprep.subr.mxu0 0.0
        %1751 = vmatpush1.msra.mxu0 0.0
        %1752 = vmatprep.subr.mxu0 0.0
        %1753 = vmatpush1.msra.mxu0 0.0
        %1754 = vmatprep.subr.mxu0 0.0
        %1755 = vmatpush1.msra.mxu0 0.0
        %1756 = vmatprep.subr.mxu0 0.0
        %1757 = vmatpush1.msra.mxu0 0.0
        %1758 = vmatprep.subr.mxu0 0.0
        %1759 = vmatpush1.msra.mxu0 0.0
        %1760 = vmatprep.mubr.f32.mxu0 0.0
        %1761 = vmatmul.mubr.f32.gmra.mrb[0].mxu0 %v1694
        %v1762 = vpop.f32.mrb[0].mxu0
        %v1763 = vadd.f32 0.0, %v1762
        %v1764 = vpop.f32.mrb[0].mxu0
        %1765 = vdwg.mxu0
        %v1766 = vrcp.pop %v1689
        %v1767 = vmul.f32 %v1763, %v1766
        %1769 = vrot.lane.b32.xlu0 %v777, 16
        %v1770 = vpop.permute.xlu0 %1769
        %1773 = vrot.lane.b32.xlu0 %v942, 32
        %v1774 = vpop.permute.xlu0 %1773
        %1777 = vrot.lane.b32.xlu0 %v1107, 48
        %v1778 = vpop.permute.xlu0 %1777
        %1781 = vrot.lane.b32.xlu0 %v1272, 64
        %v1782 = vpop.permute.xlu0 %1781
        %1785 = vrot.lane.b32.xlu0 %v1437, 80
        %v1786 = vpop.permute.xlu0 %1785
        %1789 = vrot.lane.b32.xlu0 %v1602, 96
        %v1790 = vpop.permute.xlu0 %1789
        %1793 = vrot.lane.b32.xlu0 %v1767, 112
        %v1794 = vpop.permute.xlu0 %1793
        %v1796 = vsel %vm450, %v611, %v1770
        %vm1797 = vcmask 261120
        %v1798 = vsel %vm1797, %v1796, %v1774
        %vm1799 = vcmask 392192
        %v1800 = vsel %vm1799, %v1798, %v1778
        %vm1801 = vcmask 523264
        %v1802 = vsel %vm1801, %v1800, %v1782
        %vm1803 = vcmask 654336
        %v1804 = vsel %vm1803, %v1802, %v1786
        %vm1805 = vcmask 785408
        %v1806 = vsel %vm1805, %v1804, %v1790
        %vm1807 = vcmask 916480
        %v1808 = vsel %vm1807, %v1806, %v1794
        %v1810 = vlaneseq
        %v1811 = vshrl.u32 %v1810, 7
        %v1812 = vsub.s32 0, %v1811
        %v1813 = vrot.slane %v306, %v1812
        %1815 = vmatprep.subr.mxu0 0.0
        %1816 = vmatpush1.msra.mxu0 %v290
        %1817 = vmatprep.subr.mxu0 0.0
        %1818 = vmatpush1.msra.mxu0 %v291
        %1819 = vmatprep.subr.mxu0 0.0
        %1820 = vmatpush1.msra.mxu0 %v292
        %1821 = vmatprep.subr.mxu0 0.0
        %1822 = vmatpush1.msra.mxu0 %v293
        %1823 = vmatprep.subr.mxu0 0.0
        %1824 = vmatpush1.msra.mxu0 %v294
        %1825 = vmatprep.subr.mxu0 0.0
        %1826 = vmatpush1.msra.mxu0 %v295
        %1827 = vmatprep.subr.mxu0 0.0
        %1828 = vmatpush1.msra.mxu0 %v296
        %1829 = vmatprep.subr.mxu0 0.0
        %1830 = vmatpush1.msra.mxu0 %v297
        %1831 = vmatprep.subr.mxu0 0.0
        %1832 = vmatpush1.msra.mxu0 %v298
        %1833 = vmatprep.subr.mxu0 0.0
        %1834 = vmatpush1.msra.mxu0 %v299
        %1835 = vmatprep.subr.mxu0 0.0
        %1836 = vmatpush1.msra.mxu0 %v300
        %1837 = vmatprep.subr.mxu0 0.0
        %1838 = vmatpush1.msra.mxu0 %v301
        %1839 = vmatprep.subr.mxu0 0.0
        %1840 = vmatpush1.msra.mxu0 %v302
        %1841 = vmatprep.subr.mxu0 0.0
        %1842 = vmatpush1.msra.mxu0 %v303
        %1843 = vmatprep.subr.mxu0 0.0
        %1844 = vmatpush1.msra.mxu0 %v304
        %1845 = vmatprep.subr.mxu0 0.0
        %1846 = vmatpush1.msra.mxu0 %v305
        %1847 = vmatprep.subr.mxu0 0.0
        %1848 = vmatpush1.msra.mxu0 0.0
        %1849 = vmatprep.subr.mxu0 0.0
        %1850 = vmatpush1.msra.mxu0 0.0
        %1851 = vmatprep.subr.mxu0 0.0
        %1852 = vmatpush1.msra.mxu0 0.0
        %1853 = vmatprep.subr.mxu0 0.0
        %1854 = vmatpush1.msra.mxu0 0.0
        %1855 = vmatprep.subr.mxu0 0.0
        %1856 = vmatpush1.msra.mxu0 0.0
        %1857 = vmatprep.subr.mxu0 0.0
        %1858 = vmatpush1.msra.mxu0 0.0
        %1859 = vmatprep.subr.mxu0 0.0
        %1860 = vmatpush1.msra.mxu0 0.0
        %1861 = vmatprep.subr.mxu0 0.0
        %1862 = vmatpush1.msra.mxu0 0.0
        %1863 = vmatprep.subr.mxu0 0.0
        %1864 = vmatpush1.msra.mxu0 0.0
        %1865 = vmatprep.subr.mxu0 0.0
        %1866 = vmatpush1.msra.mxu0 0.0
        %1867 = vmatprep.subr.mxu0 0.0
        %1868 = vmatpush1.msra.mxu0 0.0
        %1869 = vmatprep.subr.mxu0 0.0
        %1870 = vmatpush1.msra.mxu0 0.0
        %1871 = vmatprep.subr.mxu0 0.0
        %1872 = vmatpush1.msra.mxu0 0.0
        %1873 = vmatprep.subr.mxu0 0.0
        %1874 = vmatpush1.msra.mxu0 0.0
        %1875 = vmatprep.subr.mxu0 0.0
        %1876 = vmatpush1.msra.mxu0 0.0
        %1877 = vmatprep.subr.mxu0 0.0
        %1878 = vmatpush1.msra.mxu0 0.0
        %1879 = vmatprep.mubr.f32.mxu0 0.0
        %1880 = vmatmul.mubr.f32.gmra.mrb[0].mxu0 %v1808
        %v1881 = vpop.f32.mrb[0].mxu0
        %v1882 = vadd.f32 %v1813, %v1881
        %v1883 = vpop.f32.mrb[0].mxu0
        %1884 = vdwg.mxu0
        %1885 = vst [vmem:[%s241] sm:$0xff] %v1882
        %s1886 = sand.u32 %s119, 1
        %s1887 = scalar_lea.sflag [#allocation4], %s1886
        %s1888 = sand.u32 %s119, 1
        %s1889 = smul.addr %s1888, 8
        %s1890 = scalar_lea.vmem [#allocation8], %s1889
        // Predicated region
        $region49: #{tpu_custom_call.1} parent=35 // pred_check
          %p1891 = pneg %p129
        $region50: #{tpu_custom_call.1} parent=35 // pred_check_branch
          %1893 = sbr.rel (%p1891) target = $region52
        $region51: #{tpu_custom_call.1} parent=35 // pred_region
          %s1895 = ssub.s32 128, 128
          %1896 = vsyncadd %s1887, %s1895
          %s1897 = smul.addr %s22, 128
          %s1898 = scalar_lea.hbm %s4, %s1897
          %s1900 = sshll.u32 %s1890, 4
          %s1901 = int_to_ptr.vmem [resolvable:$true] %s1900
          %1903 = dma.vmem_to_hbm [thread:$0]  %s1901, 128, %s1898, %s1887
        $region52: #{tpu_custom_call.1} parent=35 // pred_fallthru
          _
      $region36: #{tpu_custom_call.1} parent=5 // pred_fallthru
        _
      %p1904 = scmp.le.s32.totalorder 2, %s17
      // Predicated region
      $region53: #{tpu_custom_call.1} parent=5 // pred_check
        %p1905 = pneg %p1904
      $region54: #{tpu_custom_call.1} parent=5 // pred_check_branch
        %1907 = sbr.rel (%p1905) target = $region56
      $region55: #{tpu_custom_call.1} parent=5 // pred_region
        %s1908 = ssub.s32 %s17, 2
        // Predicated region
        $region57: #{tpu_custom_call.1} parent=55 // pred_check
          %p1909 = pneg %p135
        $region58: #{tpu_custom_call.1} parent=55 // pred_check_branch
          %1911 = sbr.rel (%p1909) target = $region60
        $region59: #{tpu_custom_call.1} parent=55 // pred_region
          %s1912 = sand.u32 %s120, 1
          %s1913 = scalar_lea.sflag [#allocation4], %s1912
          %s1914 = sand.u32 %s120, 1
          %s1915 = smul.addr %s1914, 8
          %s1916 = scalar_lea.vmem [#allocation8], %s1915
          %1917 = dma.done %s1913, 128
        $region60: #{tpu_custom_call.1} parent=55 // pred_fallthru
          _
      $region56: #{tpu_custom_call.1} parent=5 // pred_fallthru
        _
    $region6: #{tpu_custom_call.1} parent=1 // loop_footer
      %s21 = sadd.s32 1, %s17
    $region7: #{tpu_custom_call.1} parent=1 // loop_footer_branch
      %16 = sbr.rel target = $region3
    $region8: #{tpu_custom_call.1} parent=1 // loop_exit
      _
    %1918 = vsyncpa [#allocation3], 1
    %s1919 = scalar_lea.sflag [#allocation3], 1
    %1920 = vsyncpa %s1919, 1
    %1921 = vsyncpa [#allocation6], 1
    %1922 = vsyncpa [#allocation4], 1
    %s1923 = scalar_lea.sflag [#allocation4], 1
    %1924 = vsyncpa %s1923, 1

</llo_original>
